<compile_context>
chip_gen: v7x
topology: tpu7x:2x2x1
jax: 0.10.0
libtpu: 0.0.40
codegen_flags: <defaults>
</compile_context>

<pallas_src>
import functools

import numpy as np
import jax
import jax.numpy as jnp
from jax import lax
from jax.experimental import pallas as pl
from jax.experimental.pallas import tpu as pltpu

# ----------------------------- STOI constants (pystoi) -----------------------
FS = 10000            # STOI operates at 10 kHz
N_FRAME = 256         # frame length
HOP = N_FRAME // 2    # 50% overlap
NFFT = 512            # FFT size
NUMBAND = 15          # number of 1/3 octave bands
NB_PAD = 16           # bands padded to 16 -> per-pair lane group of 16
MINFREQ = 150         # lowest band center frequency
N_SEG = 30            # frames per analysis segment (N)
BETA = -15.0          # SDR clipping bound
EPS = 1e-8            # float32-scale regularizer
CLIP = 1.0 + 10.0 ** (-BETA / 20.0)
NFREQ = NFFT // 2 + 1  # 257 rfft bins
NFREQ_USED = 256       # OBM is zero above bin ~219 -> keeping 256 bins is lossless


def _round_up(x, m):
    return ((x + m - 1) // m) * m


def _thirdoct(fs, nfft, num_bands, min_freq):
    """1/3-octave band matrix (pystoi.utils.thirdoct)."""
    f = np.linspace(0, fs, nfft + 1)[: nfft // 2 + 1]
    k = np.arange(num_bands).astype(float)
    cf = (2.0 ** (1.0 / 3.0)) ** k * min_freq
    freq_low = min_freq * 2.0 ** ((2 * k - 1) / 6.0)
    freq_high = min_freq * 2.0 ** ((2 * k + 1) / 6.0)
    obm = np.zeros((num_bands, len(f)))
    for i in range(len(cf)):
        fl_ii = int(np.argmin((f - freq_low[i]) ** 2))
        fh_ii = int(np.argmin((f - freq_high[i]) ** 2))
        obm[i, fl_ii:fh_ii] = 1.0
    return obm


def _make_constants():
    """Fused windowed real-DFT matrix [Wre | Wim] (256,512) + OBM^T (256,16)."""
    n = np.arange(N_FRAME)
    # np.hanning(258)[1:-1] (pystoi's analysis window)
    w = 0.5 - 0.5 * np.cos(2.0 * np.pi * (n + 1) / (N_FRAME + 1))
    k = np.arange(NFREQ_USED)
    phase = 2.0 * np.pi * np.outer(n, k) / NFFT              # (256, 256)
    wre = w[:, None] * np.cos(phase)
    wim = -w[:, None] * np.sin(phase)
    w_ri = np.concatenate([wre, wim], axis=1)                # (256, 512)
    obm = _thirdoct(FS, NFFT, NUMBAND, MINFREQ)              # (15, 257)
    assert np.all(obm[:, NFREQ_USED:] == 0.0)                # dropping bins is lossless
    obm_t = np.zeros((NFREQ_USED, NB_PAD))
    obm_t[:, :NUMBAND] = obm[:, :NFREQ_USED].T
    return w_ri.astype(np.float32), obm_t.astype(np.float32)


# ----------------------------- device-aware sizing ---------------------------
def _device_vmem_bytes():
    try:
        cap = int(pltpu.get_tpu_info().vmem_capacity_bytes)
        if cap > 0:
            return cap
    except Exception:
        pass
    kind = ""
    try:
        kind = jax.devices()[0].device_kind.lower()
    except Exception:
        pass
    return (64 << 20) if "v7" in kind else (128 << 20)


def _block_vmem_estimate(bt, nf_pad, n_seg_pad, frames_sc):
    m = 2 * bt * nf_pad
    lanes = max(bt * NB_PAD, 128)
    return (
        2 * m * N_FRAME * 2                  # bf16 frame block, double buffered
        + m * 2 * NFREQ_USED * 4             # re|im f32 intermediate
        + m * NFREQ_USED * 4                 # power spectrum f32
        + m * 128 * 4                        # band magnitudes (lane padded)
        + 2 * frames_sc * lanes * 4          # x/y band-TF scratch
        + 10 * n_seg_pad * lanes * 4         # segment accumulators / corr
        + 2 * N_FRAME * 2 * NFREQ_USED * 2   # [Wre|Wim] bf16, double buffered
        + 2 * NFREQ_USED * 128 * 4           # OBM^T
        + 2 * n_seg_pad * nf_pad * 4         # banded segment-window matrix
        + 2 * bt * NB_PAD * 128 * 4          # per-pair lane-fold matrix
    )


def _choose_block_pairs(B, nf_pad, n_seg_pad, frames_sc, budget_bytes):
    divisors = [d for d in range(1, min(B, 16) + 1) if B % d == 0]
    fitting = [d for d in divisors
               if _block_vmem_estimate(d, nf_pad, n_seg_pad, frames_sc) <= budget_bytes]
    if not fitting:
        fitting = [1]
    # prefer >= 2 grid steps so the "parallel" grid axis can feed both v7x cores
    multi = [d for d in fitting if B // d >= 2]
    pool = multi if multi else fitting
    return max(pool)


# ----------------------------- Pallas kernel ---------------------------------
def _stoi_kernel(frames_ref, wri_ref, obm_ref, wseg_ref, gmat_ref, out_ref,
                 x_sc, y_sc, *, block_pairs, nf_pad, n_seg, n_seg_pad):
    lanes = block_pairs * NB_PAD

    # Zero staging scratch (covers padded rows that pass 2 reads).
    x_sc[...] = jnp.zeros_like(x_sc)
    y_sc[...] = jnp.zeros_like(y_sc)

    # ---- windowed real DFT + 1/3-octave band magnitudes (MXU) ---------------
    frames = frames_ref[0]                                     # (2*Bt*nf_pad, 256) bf16
    reim = jnp.dot(frames, wri_ref[...],
                   preferred_element_type=jnp.float32)         # (M, 512) f32
    re = reim[:, :NFREQ_USED]
    im = reim[:, NFREQ_USED:]
    power = re * re + im * im                                  # |STFT|^2
    tob = jnp.sqrt(jnp.dot(power, obm_ref[...],
                           preferred_element_type=jnp.float32))  # (M, 16); lane 15 = 0

    # ---- stage lane-dense: frames on sublanes, (pair, band) on lanes --------
    # Row layout of `tob`: [clean p0 .. clean p_{Bt-1}, enh p0 .. enh p_{Bt-1}],
    # each pair block is nf_pad (multiple of 8) rows -> sublane-aligned slices.
    for p in range(block_pairs):
        xp = lax.slice_in_dim(tob, p * nf_pad, (p + 1) * nf_pad, axis=0)
        yp = lax.slice_in_dim(tob, (block_pairs + p) * nf_pad,
                              (block_pairs + p + 1) * nf_pad, axis=0)
        x_sc[pl.ds(0, nf_pad), pl.ds(p * NB_PAD, NB_PAD)] = xp
        y_sc[pl.ds(0, nf_pad), pl.ds(p * NB_PAD, NB_PAD)] = yp

    # ---- pass 1: 30-frame sliding raw sums for ALL segments via MXU ---------
    x_full = x_sc[pl.ds(0, nf_pad), :]                         # (nf_pad, lanes)
    y_full = y_sc[pl.ds(0, nf_pad), :]
    wseg = wseg_ref[...]                                       # (n_seg_pad, nf_pad) 0/1
    s_x = jnp.dot(wseg, x_full, preferred_element_type=jnp.float32)
    s_x2 = jnp.dot(wseg, x_full * x_full, preferred_element_type=jnp.float32)
    s_y2 = jnp.dot(wseg, y_full * y_full, preferred_element_type=jnp.float32)

    # alpha = ||x_seg|| / ||y_seg|| per (segment, band)
    alpha = jnp.sqrt(s_x2) * lax.rsqrt(s_y2 + EPS)             # (n_seg_pad, lanes)

    # ---- pass 2: alpha-scaled, clipped y' statistics (alpha-dependent) ------
    s_yp = jnp.zeros((n_seg_pad, lanes), jnp.float32)
    s_yp2 = jnp.zeros((n_seg_pad, lanes), jnp.float32)
    s_xyp = jnp.zeros((n_seg_pad, lanes), jnp.float32)
    for j in range(N_SEG):                                     # fixed 30 steps
        xw = x_sc[pl.ds(j, n_seg_pad), :]                      # (n_seg_pad, lanes)
        yw = y_sc[pl.ds(j, n_seg_pad), :]
        ypc = jnp.minimum(yw * alpha, xw * CLIP)               # clipped & scaled
        s_yp = s_yp + ypc
        s_yp2 = s_yp2 + ypc * ypc
        s_xyp = s_xyp + xw * ypc

    # ---- per-(segment, band) normalized correlation -------------------------
    inv_n = 1.0 / N_SEG
    m_x = s_x * inv_n
    m_yp = s_yp * inv_n
    cross = s_xyp - s_x * m_yp                                 # sum(xc * ypc)
    var_x = jnp.maximum(s_x2 - s_x * m_x, 0.0)                 # sum(xc^2)
    var_yp = jnp.maximum(s_yp2 - s_yp * m_yp, 0.0)             # sum(ypc^2)
    corr = cross * lax.rsqrt(var_x * var_yp + EPS)             # (n_seg_pad, lanes)

    # ---- epilogue: mask padded segments, fold per-pair lane groups ----------
    seg_id = lax.broadcasted_iota(jnp.int32, (n_seg_pad, lanes), 0)
    corr = jnp.where(seg_id < n_seg, corr, 0.0)
    folded = jnp.dot(corr, gmat_ref[...],
                     preferred_element_type=jnp.float32)       # (n_seg_pad, 128)
    inv_cnt = 1.0 / (n_seg * NUMBAND)
    scores = jnp.sum(folded, axis=0, keepdims=True) * inv_cnt  # (1, 128)
    out_ref[...] = scores.reshape(1, 1, 128)


# ----------------------------- wrapper ---------------------------------------
def metric_stoi(clean, enhanced, sr=FS, extended=False):
    """Batched STOI scores, shape (B,), float32."""
    assert clean.shape == enhanced.shape and clean.ndim == 2
    assert sr == FS, "TODO(synk): resampling for sr != 10000 not implemented"
    assert not extended, "TODO(synk): extended STOI not implemented"
    # TODO(synk): remove_silent_frames (data-dependent frame dropping) not implemented.

    B, L = clean.shape
    n_frames = len(range(0, L - N_FRAME, HOP))
    assert n_frames >= N_SEG, "signal too short for STOI"
    n_seg = n_frames - N_SEG + 1
    nf_pad = _round_up(n_frames, 8)                        # sublane-aligned pair blocks
    n_seg_pad = _round_up(n_seg, 8)
    frames_sc = max(nf_pad, n_seg_pad + _round_up(N_SEG - 1, 8))

    vmem_cap = _device_vmem_bytes()
    vmem_limit = min(48 << 20, vmem_cap * 5 // 8)          # headroom on 64 MiB parts
    bt = _choose_block_pairs(B, nf_pad, n_seg_pad, frames_sc, vmem_limit // 2)
    nb = B // bt
    lanes = bt * NB_PAD
    m_rows = 2 * bt * nf_pad

    # ---- framing (glue): 50%-overlap frames via reshape + concat (no gather) ----
    # TODO(synk): in-kernel framing (DMA HOP-sized chunks) would halve input HBM bytes.
    n_chunks = L // HOP
    assert n_frames + 1 <= n_chunks

    def frame(sig):
        chunks = sig[:, : n_chunks * HOP].reshape(B, n_chunks, HOP)
        fr = jnp.concatenate([chunks[:, :n_frames], chunks[:, 1:n_frames + 1]], axis=-1)
        if nf_pad > n_frames:
            fr = jnp.pad(fr, ((0, 0), (0, nf_pad - n_frames), (0, 0)))
        return fr                                           # (B, nf_pad, 256)

    cframes = frame(clean)
    eframes = frame(enhanced)
    stacked = jnp.stack([cframes, eframes], axis=0)         # (2, B, nf_pad, 256)
    stacked = stacked.reshape(2, nb, bt, nf_pad, N_FRAME)
    stacked = jnp.transpose(stacked, (1, 0, 2, 3, 4))       # (nb, 2, bt, nf_pad, 256)
    frames_all = stacked.reshape(nb, m_rows, N_FRAME).astype(jnp.bfloat16)

    w_ri_np, obm_np = _make_constants()
    w_ri = jnp.asarray(w_ri_np, dtype=jnp.bfloat16)         # (256, 512)
    obm = jnp.asarray(obm_np, dtype=jnp.float32)            # (256, 16)

    # banded segment-window matrix: W[s, f] = 1 for s <= f < s+30, s < n_seg
    wseg_np = np.zeros((n_seg_pad, nf_pad), np.float32)
    for s in range(n_seg):
        wseg_np[s, s:s + N_SEG] = 1.0
    wseg = jnp.asarray(wseg_np)

    # per-pair lane-group fold: lanes [p*16, (p+1)*16) -> output lane p
    gmat_np = np.zeros((lanes, 128), np.float32)
    for p in range(bt):
        gmat_np[p * NB_PAD:(p + 1) * NB_PAD, p] = 1.0
    gmat = jnp.asarray(gmat_np)

    kernel = functools.partial(_stoi_kernel, block_pairs=bt, nf_pad=nf_pad,
                               n_seg=n_seg, n_seg_pad=n_seg_pad)

    out = pl.pallas_call(
        kernel,
        out_shape=jax.ShapeDtypeStruct((nb, 1, 128), jnp.float32),
        grid_spec=pltpu.PrefetchScalarGridSpec(
            num_scalar_prefetch=0,
            grid=(nb,),
            in_specs=[
                pl.BlockSpec((1, m_rows, N_FRAME), lambda g: (g, 0, 0)),
                pl.BlockSpec((N_FRAME, 2 * NFREQ_USED), lambda g: (0, 0)),
                pl.BlockSpec((NFREQ_USED, NB_PAD), lambda g: (0, 0)),
                pl.BlockSpec((n_seg_pad, nf_pad), lambda g: (0, 0)),
                pl.BlockSpec((lanes, 128), lambda g: (0, 0)),
            ],
            out_specs=pl.BlockSpec((1, 1, 128), lambda g: (g, 0, 0)),
            scratch_shapes=[
                pltpu.VMEM((frames_sc, lanes), jnp.float32),   # clean band TF (lane-dense)
                pltpu.VMEM((frames_sc, lanes), jnp.float32),   # enhanced band TF
            ],
        ),
        compiler_params=pltpu.CompilerParams(
            dimension_semantics=("parallel",),       # batch blocks are independent
            vmem_limit_bytes=int(vmem_limit),
        ),
    )(frames_all, w_ri, obm, wseg, gmat)

    scores = out[:, 0, :bt].reshape(B)               # lanes 0..bt-1 hold the scores
    return scores


# ----------------------------- main -------------------------------------------
if __name__ == "__main__":
    B, L = 2, 5120                     # 38 frames -> 9 analysis segments
    key = jax.random.PRNGKey(0)
    k1, k2 = jax.random.split(key)
    clean = jax.random.normal(k1, (B, L), dtype=jnp.float32)
    noise = jax.random.normal(k2, (B, L), dtype=jnp.float32)
    enhanced = clean + 0.5 * noise     # degraded version of clean

    scores = metric_stoi(clean, enhanced, sr=10000, extended=False)
    jax.block_until_ready(scores)
    assert scores.shape == (B,) and scores.dtype == jnp.float32
    assert bool(jnp.all(jnp.isfinite(scores)))
    print("KERNEL_OK")
</pallas_src>

<mosaic_0001>
module attributes {stable_mosaic.version = 11 : i64} {
  func.func @_stoi_kernel(%arg0: i32, %arg1: memref<1x80x256xbf16, #tpu.memory_space<vmem>>, %arg2: memref<256x512xbf16, #tpu.memory_space<vmem>>, %arg3: memref<256x16xf32, #tpu.memory_space<vmem>>, %arg4: memref<16x40xf32, #tpu.memory_space<vmem>>, %arg5: memref<16x128xf32, #tpu.memory_space<vmem>>, %arg6: memref<1x1x128xf32, #tpu.memory_space<vmem>>, %arg7: memref<48x16xf32, #tpu.memory_space<vmem>>, %arg8: memref<48x16xf32, #tpu.memory_space<vmem>>) attributes {dimension_semantics = [#tpu.dimension_semantics<parallel>], iteration_bounds = array<i64: 2>, scalar_prefetch = 0 : i64, scratch_operands = 2 : i64, tpu.core_type = #tpu.core_type<tc>, window_params = [{transform_indices = @transform_0, window_bounds = array<i64: 1, 80, 256>}, {pipeline_mode = #tpu.pipeline_mode<synchronous>, transform_indices = @transform_1, window_bounds = array<i64: 256, 512>}, {pipeline_mode = #tpu.pipeline_mode<synchronous>, transform_indices = @transform_2, window_bounds = array<i64: 256, 16>}, {pipeline_mode = #tpu.pipeline_mode<synchronous>, transform_indices = @transform_3, window_bounds = array<i64: 16, 40>}, {pipeline_mode = #tpu.pipeline_mode<synchronous>, transform_indices = @transform_4, window_bounds = array<i64: 16, 128>}, {transform_indices = @transform_5, window_bounds = array<i64: 1, 1, 128>}]} {
    %cst = arith.constant 0.000000e+00 : f32
    %0 = vector.broadcast %cst : f32 to vector<48x16xf32>
    %c0 = arith.constant 0 : index
    %c0_0 = arith.constant 0 : index
    %1 = vector.load %arg7[%c0, %c0_0] : memref<48x16xf32, #tpu.memory_space<vmem>>, vector<48x16xf32>
    tpu.vector_store %arg7[%c0, %c0_0], %0 {strides = array<i32>} : memref<48x16xf32, #tpu.memory_space<vmem>>, vector<48x16xf32>,
    %cst_1 = arith.constant 0.000000e+00 : f32
    %2 = vector.broadcast %cst_1 : f32 to vector<48x16xf32>
    %c0_2 = arith.constant 0 : index
    %c0_3 = arith.constant 0 : index
    %3 = vector.load %arg8[%c0_2, %c0_3] : memref<48x16xf32, #tpu.memory_space<vmem>>, vector<48x16xf32>
    tpu.vector_store %arg8[%c0_2, %c0_3], %2 {strides = array<i32>} : memref<48x16xf32, #tpu.memory_space<vmem>>, vector<48x16xf32>,
    %c0_4 = arith.constant 0 : index
    %c0_5 = arith.constant 0 : index
    %c0_6 = arith.constant 0 : index
    %4 = vector.load %arg1[%c0_4, %c0_5, %c0_6] : memref<1x80x256xbf16, #tpu.memory_space<vmem>>, vector<1x80x256xbf16>
    %5 = vector.shape_cast %4 : vector<1x80x256xbf16> to vector<80x256xbf16>
    %c0_7 = arith.constant 0 : index
    %c0_8 = arith.constant 0 : index
    %6 = vector.load %arg2[%c0_7, %c0_8] : memref<256x512xbf16, #tpu.memory_space<vmem>>, vector<256x512xbf16>
    %cst_9 = arith.constant dense<0.000000e+00> : vector<80x512xf32>
    %7 = tpu.matmul %5, %6, %cst_9 {dimension_numbers = #tpu.dot_dimension_numbers<[1], [0], [0], [1], [0, 0, 1, 1], [], []>} : vector<80x256xbf16>, vector<256x512xbf16>, vector<80x512xf32> -> vector<80x512xf32>
    %8 = vector.extract_strided_slice %7 {offsets = [0, 0], sizes = [80, 256], strides = [1, 1]} : vector<80x512xf32> to vector<80x256xf32>
    %9 = vector.extract_strided_slice %7 {offsets = [0, 256], sizes = [80, 256], strides = [1, 1]} : vector<80x512xf32> to vector<80x256xf32>
    %10 = arith.mulf %8, %8 : vector<80x256xf32>
    %11 = arith.mulf %9, %9 : vector<80x256xf32>
    %12 = arith.addf %10, %11 : vector<80x256xf32>
    %c0_10 = arith.constant 0 : index
    %c0_11 = arith.constant 0 : index
    %13 = vector.load %arg3[%c0_10, %c0_11] : memref<256x16xf32, #tpu.memory_space<vmem>>, vector<256x16xf32>
    %cst_12 = arith.constant dense<0.000000e+00> : vector<80x16xf32>
    %14 = tpu.matmul %12, %13, %cst_12 {dimension_numbers = #tpu.dot_dimension_numbers<[1], [0], [0], [1], [0, 0, 1, 1], [], []>} : vector<80x256xf32>, vector<256x16xf32>, vector<80x16xf32> -> vector<80x16xf32>
    %15 = math.sqrt %14 : vector<80x16xf32>
    %16 = vector.extract_strided_slice %15 {offsets = [0, 0], sizes = [40, 16], strides = [1, 1]} : vector<80x16xf32> to vector<40x16xf32>
    %17 = vector.extract_strided_slice %15 {offsets = [40, 0], sizes = [40, 16], strides = [1, 1]} : vector<80x16xf32> to vector<40x16xf32>
    %c0_13 = arith.constant 0 : index
    %c0_14 = arith.constant 0 : index
    %18 = vector.load %arg7[%c0_13, %c0_14] : memref<48x16xf32, #tpu.memory_space<vmem>>, vector<40x16xf32>
    tpu.vector_store %arg7[%c0_13, %c0_14], %16 {strides = array<i32>} : memref<48x16xf32, #tpu.memory_space<vmem>>, vector<40x16xf32>,
    %c0_15 = arith.constant 0 : index
    %c0_16 = arith.constant 0 : index
    %19 = vector.load %arg8[%c0_15, %c0_16] : memref<48x16xf32, #tpu.memory_space<vmem>>, vector<40x16xf32>
    tpu.vector_store %arg8[%c0_15, %c0_16], %17 {strides = array<i32>} : memref<48x16xf32, #tpu.memory_space<vmem>>, vector<40x16xf32>,
    %c0_17 = arith.constant 0 : index
    %c0_18 = arith.constant 0 : index
    %20 = vector.load %arg7[%c0_17, %c0_18] : memref<48x16xf32, #tpu.memory_space<vmem>>, vector<40x16xf32>
    %c0_19 = arith.constant 0 : index
    %c0_20 = arith.constant 0 : index
    %21 = vector.load %arg8[%c0_19, %c0_20] : memref<48x16xf32, #tpu.memory_space<vmem>>, vector<40x16xf32>
    %c0_21 = arith.constant 0 : index
    %c0_22 = arith.constant 0 : index
    %22 = vector.load %arg4[%c0_21, %c0_22] : memref<16x40xf32, #tpu.memory_space<vmem>>, vector<16x40xf32>
    %cst_23 = arith.constant dense<0.000000e+00> : vector<16x16xf32>
    %23 = tpu.matmul %22, %20, %cst_23 {dimension_numbers = #tpu.dot_dimension_numbers<[1], [0], [0], [1], [0, 0, 1, 1], [], []>} : vector<16x40xf32>, vector<40x16xf32>, vector<16x16xf32> -> vector<16x16xf32>
    %24 = arith.mulf %20, %20 : vector<40x16xf32>
    %cst_24 = arith.constant dense<0.000000e+00> : vector<16x16xf32>
    %25 = tpu.matmul %22, %24, %cst_24 {dimension_numbers = #tpu.dot_dimension_numbers<[1], [0], [0], [1], [0, 0, 1, 1], [], []>} : vector<16x40xf32>, vector<40x16xf32>, vector<16x16xf32> -> vector<16x16xf32>
    %26 = arith.mulf %21, %21 : vector<40x16xf32>
    %cst_25 = arith.constant dense<0.000000e+00> : vector<16x16xf32>
    %27 = tpu.matmul %22, %26, %cst_25 {dimension_numbers = #tpu.dot_dimension_numbers<[1], [0], [0], [1], [0, 0, 1, 1], [], []>} : vector<16x40xf32>, vector<40x16xf32>, vector<16x16xf32> -> vector<16x16xf32>
    %28 = math.sqrt %25 : vector<16x16xf32>
    %cst_26 = arith.constant 9.99999993E-9 : f32
    %29 = vector.broadcast %cst_26 : f32 to vector<16x16xf32>
    %30 = arith.addf %27, %29 : vector<16x16xf32>
    %31 = math.rsqrt %30 : vector<16x16xf32>
    %32 = arith.mulf %28, %31 : vector<16x16xf32>
    %cst_27 = arith.constant 0.000000e+00 : f32
    %33 = vector.broadcast %cst_27 : f32 to vector<16x16xf32>
    %cst_28 = arith.constant 0.000000e+00 : f32
    %34 = vector.broadcast %cst_28 : f32 to vector<16x16xf32>
    %cst_29 = arith.constant 0.000000e+00 : f32
    %35 = vector.broadcast %cst_29 : f32 to vector<16x16xf32>
    %c0_30 = arith.constant 0 : index
    %c0_31 = arith.constant 0 : index
    %36 = vector.load %arg7[%c0_30, %c0_31] : memref<48x16xf32, #tpu.memory_space<vmem>>, vector<16x16xf32>
    %c0_32 = arith.constant 0 : index
    %c0_33 = arith.constant 0 : index
    %37 = vector.load %arg8[%c0_32, %c0_33] : memref<48x16xf32, #tpu.memory_space<vmem>>, vector<16x16xf32>
    %38 = arith.mulf %37, %32 : vector<16x16xf32>
    %cst_34 = arith.constant 6.62341309 : f32
    %39 = vector.broadcast %cst_34 : f32 to vector<16x16xf32>
    %40 = arith.mulf %36, %39 : vector<16x16xf32>
    %41 = arith.minimumf %38, %40 : vector<16x16xf32>
    %42 = arith.addf %33, %41 : vector<16x16xf32>
    %43 = arith.mulf %41, %41 : vector<16x16xf32>
    %44 = arith.addf %34, %43 : vector<16x16xf32>
    %45 = arith.mulf %36, %41 : vector<16x16xf32>
    %46 = arith.addf %35, %45 : vector<16x16xf32>
    %c1 = arith.constant 1 : index
    %c0_35 = arith.constant 0 : index
    %47 = vector.load %arg7[%c1, %c0_35] : memref<48x16xf32, #tpu.memory_space<vmem>>, vector<16x16xf32>
    %c1_36 = arith.constant 1 : index
    %c0_37 = arith.constant 0 : index
    %48 = vector.load %arg8[%c1_36, %c0_37] : memref<48x16xf32, #tpu.memory_space<vmem>>, vector<16x16xf32>
    %49 = arith.mulf %48, %32 : vector<16x16xf32>
    %cst_38 = arith.constant 6.62341309 : f32
    %50 = vector.broadcast %cst_38 : f32 to vector<16x16xf32>
    %51 = arith.mulf %47, %50 : vector<16x16xf32>
    %52 = arith.minimumf %49, %51 : vector<16x16xf32>
    %53 = arith.addf %42, %52 : vector<16x16xf32>
    %54 = arith.mulf %52, %52 : vector<16x16xf32>
    %55 = arith.addf %44, %54 : vector<16x16xf32>
    %56 = arith.mulf %47, %52 : vector<16x16xf32>
    %57 = arith.addf %46, %56 : vector<16x16xf32>
    %c2 = arith.constant 2 : index
    %c0_39 = arith.constant 0 : index
    %58 = vector.load %arg7[%c2, %c0_39] : memref<48x16xf32, #tpu.memory_space<vmem>>, vector<16x16xf32>
    %c2_40 = arith.constant 2 : index
    %c0_41 = arith.constant 0 : index
    %59 = vector.load %arg8[%c2_40, %c0_41] : memref<48x16xf32, #tpu.memory_space<vmem>>, vector<16x16xf32>
    %60 = arith.mulf %59, %32 : vector<16x16xf32>
    %cst_42 = arith.constant 6.62341309 : f32
    %61 = vector.broadcast %cst_42 : f32 to vector<16x16xf32>
    %62 = arith.mulf %58, %61 : vector<16x16xf32>
    %63 = arith.minimumf %60, %62 : vector<16x16xf32>
    %64 = arith.addf %53, %63 : vector<16x16xf32>
    %65 = arith.mulf %63, %63 : vector<16x16xf32>
    %66 = arith.addf %55, %65 : vector<16x16xf32>
    %67 = arith.mulf %58, %63 : vector<16x16xf32>
    %68 = arith.addf %57, %67 : vector<16x16xf32>
    %c3 = arith.constant 3 : index
    %c0_43 = arith.constant 0 : index
    %69 = vector.load %arg7[%c3, %c0_43] : memref<48x16xf32, #tpu.memory_space<vmem>>, vector<16x16xf32>
    %c3_44 = arith.constant 3 : index
    %c0_45 = arith.constant 0 : index
    %70 = vector.load %arg8[%c3_44, %c0_45] : memref<48x16xf32, #tpu.memory_space<vmem>>, vector<16x16xf32>
    %71 = arith.mulf %70, %32 : vector<16x16xf32>
    %cst_46 = arith.constant 6.62341309 : f32
    %72 = vector.broadcast %cst_46 : f32 to vector<16x16xf32>
    %73 = arith.mulf %69, %72 : vector<16x16xf32>
    %74 = arith.minimumf %71, %73 : vector<16x16xf32>
    %75 = arith.addf %64, %74 : vector<16x16xf32>
    %76 = arith.mulf %74, %74 : vector<16x16xf32>
    %77 = arith.addf %66, %76 : vector<16x16xf32>
    %78 = arith.mulf %69, %74 : vector<16x16xf32>
    %79 = arith.addf %68, %78 : vector<16x16xf32>
    %c4 = arith.constant 4 : index
    %c0_47 = arith.constant 0 : index
    %80 = vector.load %arg7[%c4, %c0_47] : memref<48x16xf32, #tpu.memory_space<vmem>>, vector<16x16xf32>
    %c4_48 = arith.constant 4 : index
    %c0_49 = arith.constant 0 : index
    %81 = vector.load %arg8[%c4_48, %c0_49] : memref<48x16xf32, #tpu.memory_space<vmem>>, vector<16x16xf32>
    %82 = arith.mulf %81, %32 : vector<16x16xf32>
    %cst_50 = arith.constant 6.62341309 : f32
    %83 = vector.broadcast %cst_50 : f32 to vector<16x16xf32>
    %84 = arith.mulf %80, %83 : vector<16x16xf32>
    %85 = arith.minimumf %82, %84 : vector<16x16xf32>
    %86 = arith.addf %75, %85 : vector<16x16xf32>
    %87 = arith.mulf %85, %85 : vector<16x16xf32>
    %88 = arith.addf %77, %87 : vector<16x16xf32>
    %89 = arith.mulf %80, %85 : vector<16x16xf32>
    %90 = arith.addf %79, %89 : vector<16x16xf32>
    %c5 = arith.constant 5 : index
    %c0_51 = arith.constant 0 : index
    %91 = vector.load %arg7[%c5, %c0_51] : memref<48x16xf32, #tpu.memory_space<vmem>>, vector<16x16xf32>
    %c5_52 = arith.constant 5 : index
    %c0_53 = arith.constant 0 : index
    %92 = vector.load %arg8[%c5_52, %c0_53] : memref<48x16xf32, #tpu.memory_space<vmem>>, vector<16x16xf32>
    %93 = arith.mulf %92, %32 : vector<16x16xf32>
    %cst_54 = arith.constant 6.62341309 : f32
    %94 = vector.broadcast %cst_54 : f32 to vector<16x16xf32>
    %95 = arith.mulf %91, %94 : vector<16x16xf32>
    %96 = arith.minimumf %93, %95 : vector<16x16xf32>
    %97 = arith.addf %86, %96 : vector<16x16xf32>
    %98 = arith.mulf %96, %96 : vector<16x16xf32>
    %99 = arith.addf %88, %98 : vector<16x16xf32>
    %100 = arith.mulf %91, %96 : vector<16x16xf32>
    %101 = arith.addf %90, %100 : vector<16x16xf32>
    %c6 = arith.constant 6 : index
    %c0_55 = arith.constant 0 : index
    %102 = vector.load %arg7[%c6, %c0_55] : memref<48x16xf32, #tpu.memory_space<vmem>>, vector<16x16xf32>
    %c6_56 = arith.constant 6 : index
    %c0_57 = arith.constant 0 : index
    %103 = vector.load %arg8[%c6_56, %c0_57] : memref<48x16xf32, #tpu.memory_space<vmem>>, vector<16x16xf32>
    %104 = arith.mulf %103, %32 : vector<16x16xf32>
    %cst_58 = arith.constant 6.62341309 : f32
    %105 = vector.broadcast %cst_58 : f32 to vector<16x16xf32>
    %106 = arith.mulf %102, %105 : vector<16x16xf32>
    %107 = arith.minimumf %104, %106 : vector<16x16xf32>
    %108 = arith.addf %97, %107 : vector<16x16xf32>
    %109 = arith.mulf %107, %107 : vector<16x16xf32>
    %110 = arith.addf %99, %109 : vector<16x16xf32>
    %111 = arith.mulf %102, %107 : vector<16x16xf32>
    %112 = arith.addf %101, %111 : vector<16x16xf32>
    %c7 = arith.constant 7 : index
    %c0_59 = arith.constant 0 : index
    %113 = vector.load %arg7[%c7, %c0_59] : memref<48x16xf32, #tpu.memory_space<vmem>>, vector<16x16xf32>
    %c7_60 = arith.constant 7 : index
    %c0_61 = arith.constant 0 : index
    %114 = vector.load %arg8[%c7_60, %c0_61] : memref<48x16xf32, #tpu.memory_space<vmem>>, vector<16x16xf32>
    %115 = arith.mulf %114, %32 : vector<16x16xf32>
    %cst_62 = arith.constant 6.62341309 : f32
    %116 = vector.broadcast %cst_62 : f32 to vector<16x16xf32>
    %117 = arith.mulf %113, %116 : vector<16x16xf32>
    %118 = arith.minimumf %115, %117 : vector<16x16xf32>
    %119 = arith.addf %108, %118 : vector<16x16xf32>
    %120 = arith.mulf %118, %118 : vector<16x16xf32>
    %121 = arith.addf %110, %120 : vector<16x16xf32>
    %122 = arith.mulf %113, %118 : vector<16x16xf32>
    %123 = arith.addf %112, %122 : vector<16x16xf32>
    %c8 = arith.constant 8 : index
    %c0_63 = arith.constant 0 : index
    %124 = vector.load %arg7[%c8, %c0_63] : memref<48x16xf32, #tpu.memory_space<vmem>>, vector<16x16xf32>
    %c8_64 = arith.constant 8 : index
    %c0_65 = arith.constant 0 : index
    %125 = vector.load %arg8[%c8_64, %c0_65] : memref<48x16xf32, #tpu.memory_space<vmem>>, vector<16x16xf32>
    %126 = arith.mulf %125, %32 : vector<16x16xf32>
    %cst_66 = arith.constant 6.62341309 : f32
    %127 = vector.broadcast %cst_66 : f32 to vector<16x16xf32>
    %128 = arith.mulf %124, %127 : vector<16x16xf32>
    %129 = arith.minimumf %126, %128 : vector<16x16xf32>
    %130 = arith.addf %119, %129 : vector<16x16xf32>
    %131 = arith.mulf %129, %129 : vector<16x16xf32>
    %132 = arith.addf %121, %131 : vector<16x16xf32>
    %133 = arith.mulf %124, %129 : vector<16x16xf32>
    %134 = arith.addf %123, %133 : vector<16x16xf32>
    %c9 = arith.constant 9 : index
    %c0_67 = arith.constant 0 : index
    %135 = vector.load %arg7[%c9, %c0_67] : memref<48x16xf32, #tpu.memory_space<vmem>>, vector<16x16xf32>
    %c9_68 = arith.constant 9 : index
    %c0_69 = arith.constant 0 : index
    %136 = vector.load %arg8[%c9_68, %c0_69] : memref<48x16xf32, #tpu.memory_space<vmem>>, vector<16x16xf32>
    %137 = arith.mulf %136, %32 : vector<16x16xf32>
    %cst_70 = arith.constant 6.62341309 : f32
    %138 = vector.broadcast %cst_70 : f32 to vector<16x16xf32>
    %139 = arith.mulf %135, %138 : vector<16x16xf32>
    %140 = arith.minimumf %137, %139 : vector<16x16xf32>
    %141 = arith.addf %130, %140 : vector<16x16xf32>
    %142 = arith.mulf %140, %140 : vector<16x16xf32>
    %143 = arith.addf %132, %142 : vector<16x16xf32>
    %144 = arith.mulf %135, %140 : vector<16x16xf32>
    %145 = arith.addf %134, %144 : vector<16x16xf32>
    %c10 = arith.constant 10 : index
    %c0_71 = arith.constant 0 : index
    %146 = vector.load %arg7[%c10, %c0_71] : memref<48x16xf32, #tpu.memory_space<vmem>>, vector<16x16xf32>
    %c10_72 = arith.constant 10 : index
    %c0_73 = arith.constant 0 : index
    %147 = vector.load %arg8[%c10_72, %c0_73] : memref<48x16xf32, #tpu.memory_space<vmem>>, vector<16x16xf32>
    %148 = arith.mulf %147, %32 : vector<16x16xf32>
    %cst_74 = arith.constant 6.62341309 : f32
    %149 = vector.broadcast %cst_74 : f32 to vector<16x16xf32>
    %150 = arith.mulf %146, %149 : vector<16x16xf32>
    %151 = arith.minimumf %148, %150 : vector<16x16xf32>
    %152 = arith.addf %141, %151 : vector<16x16xf32>
    %153 = arith.mulf %151, %151 : vector<16x16xf32>
    %154 = arith.addf %143, %153 : vector<16x16xf32>
    %155 = arith.mulf %146, %151 : vector<16x16xf32>
    %156 = arith.addf %145, %155 : vector<16x16xf32>
    %c11 = arith.constant 11 : index
    %c0_75 = arith.constant 0 : index
    %157 = vector.load %arg7[%c11, %c0_75] : memref<48x16xf32, #tpu.memory_space<vmem>>, vector<16x16xf32>
    %c11_76 = arith.constant 11 : index
    %c0_77 = arith.constant 0 : index
    %158 = vector.load %arg8[%c11_76, %c0_77] : memref<48x16xf32, #tpu.memory_space<vmem>>, vector<16x16xf32>
    %159 = arith.mulf %158, %32 : vector<16x16xf32>
    %cst_78 = arith.constant 6.62341309 : f32
    %160 = vector.broadcast %cst_78 : f32 to vector<16x16xf32>
    %161 = arith.mulf %157, %160 : vector<16x16xf32>
    %162 = arith.minimumf %159, %161 : vector<16x16xf32>
    %163 = arith.addf %152, %162 : vector<16x16xf32>
    %164 = arith.mulf %162, %162 : vector<16x16xf32>
    %165 = arith.addf %154, %164 : vector<16x16xf32>
    %166 = arith.mulf %157, %162 : vector<16x16xf32>
    %167 = arith.addf %156, %166 : vector<16x16xf32>
    %c12 = arith.constant 12 : index
    %c0_79 = arith.constant 0 : index
    %168 = vector.load %arg7[%c12, %c0_79] : memref<48x16xf32, #tpu.memory_space<vmem>>, vector<16x16xf32>
    %c12_80 = arith.constant 12 : index
    %c0_81 = arith.constant 0 : index
    %169 = vector.load %arg8[%c12_80, %c0_81] : memref<48x16xf32, #tpu.memory_space<vmem>>, vector<16x16xf32>
    %170 = arith.mulf %169, %32 : vector<16x16xf32>
    %cst_82 = arith.constant 6.62341309 : f32
    %171 = vector.broadcast %cst_82 : f32 to vector<16x16xf32>
    %172 = arith.mulf %168, %171 : vector<16x16xf32>
    %173 = arith.minimumf %170, %172 : vector<16x16xf32>
    %174 = arith.addf %163, %173 : vector<16x16xf32>
    %175 = arith.mulf %173, %173 : vector<16x16xf32>
    %176 = arith.addf %165, %175 : vector<16x16xf32>
    %177 = arith.mulf %168, %173 : vector<16x16xf32>
    %178 = arith.addf %167, %177 : vector<16x16xf32>
    %c13 = arith.constant 13 : index
    %c0_83 = arith.constant 0 : index
    %179 = vector.load %arg7[%c13, %c0_83] : memref<48x16xf32, #tpu.memory_space<vmem>>, vector<16x16xf32>
    %c13_84 = arith.constant 13 : index
    %c0_85 = arith.constant 0 : index
    %180 = vector.load %arg8[%c13_84, %c0_85] : memref<48x16xf32, #tpu.memory_space<vmem>>, vector<16x16xf32>
    %181 = arith.mulf %180, %32 : vector<16x16xf32>
    %cst_86 = arith.constant 6.62341309 : f32
    %182 = vector.broadcast %cst_86 : f32 to vector<16x16xf32>
    %183 = arith.mulf %179, %182 : vector<16x16xf32>
    %184 = arith.minimumf %181, %183 : vector<16x16xf32>
    %185 = arith.addf %174, %184 : vector<16x16xf32>
    %186 = arith.mulf %184, %184 : vector<16x16xf32>
    %187 = arith.addf %176, %186 : vector<16x16xf32>
    %188 = arith.mulf %179, %184 : vector<16x16xf32>
    %189 = arith.addf %178, %188 : vector<16x16xf32>
    %c14 = arith.constant 14 : index
    %c0_87 = arith.constant 0 : index
    %190 = vector.load %arg7[%c14, %c0_87] : memref<48x16xf32, #tpu.memory_space<vmem>>, vector<16x16xf32>
    %c14_88 = arith.constant 14 : index
    %c0_89 = arith.constant 0 : index
    %191 = vector.load %arg8[%c14_88, %c0_89] : memref<48x16xf32, #tpu.memory_space<vmem>>, vector<16x16xf32>
    %192 = arith.mulf %191, %32 : vector<16x16xf32>
    %cst_90 = arith.constant 6.62341309 : f32
    %193 = vector.broadcast %cst_90 : f32 to vector<16x16xf32>
    %194 = arith.mulf %190, %193 : vector<16x16xf32>
    %195 = arith.minimumf %192, %194 : vector<16x16xf32>
    %196 = arith.addf %185, %195 : vector<16x16xf32>
    %197 = arith.mulf %195, %195 : vector<16x16xf32>
    %198 = arith.addf %187, %197 : vector<16x16xf32>
    %199 = arith.mulf %190, %195 : vector<16x16xf32>
    %200 = arith.addf %189, %199 : vector<16x16xf32>
    %c15 = arith.constant 15 : index
    %c0_91 = arith.constant 0 : index
    %201 = vector.load %arg7[%c15, %c0_91] : memref<48x16xf32, #tpu.memory_space<vmem>>, vector<16x16xf32>
    %c15_92 = arith.constant 15 : index
    %c0_93 = arith.constant 0 : index
    %202 = vector.load %arg8[%c15_92, %c0_93] : memref<48x16xf32, #tpu.memory_space<vmem>>, vector<16x16xf32>
    %203 = arith.mulf %202, %32 : vector<16x16xf32>
    %cst_94 = arith.constant 6.62341309 : f32
    %204 = vector.broadcast %cst_94 : f32 to vector<16x16xf32>
    %205 = arith.mulf %201, %204 : vector<16x16xf32>
    %206 = arith.minimumf %203, %205 : vector<16x16xf32>
    %207 = arith.addf %196, %206 : vector<16x16xf32>
    %208 = arith.mulf %206, %206 : vector<16x16xf32>
    %209 = arith.addf %198, %208 : vector<16x16xf32>
    %210 = arith.mulf %201, %206 : vector<16x16xf32>
    %211 = arith.addf %200, %210 : vector<16x16xf32>
    %c16 = arith.constant 16 : index
    %c0_95 = arith.constant 0 : index
    %212 = vector.load %arg7[%c16, %c0_95] : memref<48x16xf32, #tpu.memory_space<vmem>>, vector<16x16xf32>
    %c16_96 = arith.constant 16 : index
    %c0_97 = arith.constant 0 : index
    %213 = vector.load %arg8[%c16_96, %c0_97] : memref<48x16xf32, #tpu.memory_space<vmem>>, vector<16x16xf32>
    %214 = arith.mulf %213, %32 : vector<16x16xf32>
    %cst_98 = arith.constant 6.62341309 : f32
    %215 = vector.broadcast %cst_98 : f32 to vector<16x16xf32>
    %216 = arith.mulf %212, %215 : vector<16x16xf32>
    %217 = arith.minimumf %214, %216 : vector<16x16xf32>
    %218 = arith.addf %207, %217 : vector<16x16xf32>
    %219 = arith.mulf %217, %217 : vector<16x16xf32>
    %220 = arith.addf %209, %219 : vector<16x16xf32>
    %221 = arith.mulf %212, %217 : vector<16x16xf32>
    %222 = arith.addf %211, %221 : vector<16x16xf32>
    %c17 = arith.constant 17 : index
    %c0_99 = arith.constant 0 : index
    %223 = vector.load %arg7[%c17, %c0_99] : memref<48x16xf32, #tpu.memory_space<vmem>>, vector<16x16xf32>
    %c17_100 = arith.constant 17 : index
    %c0_101 = arith.constant 0 : index
    %224 = vector.load %arg8[%c17_100, %c0_101] : memref<48x16xf32, #tpu.memory_space<vmem>>, vector<16x16xf32>
    %225 = arith.mulf %224, %32 : vector<16x16xf32>
    %cst_102 = arith.constant 6.62341309 : f32
    %226 = vector.broadcast %cst_102 : f32 to vector<16x16xf32>
    %227 = arith.mulf %223, %226 : vector<16x16xf32>
    %228 = arith.minimumf %225, %227 : vector<16x16xf32>
    %229 = arith.addf %218, %228 : vector<16x16xf32>
    %230 = arith.mulf %228, %228 : vector<16x16xf32>
    %231 = arith.addf %220, %230 : vector<16x16xf32>
    %232 = arith.mulf %223, %228 : vector<16x16xf32>
    %233 = arith.addf %222, %232 : vector<16x16xf32>
    %c18 = arith.constant 18 : index
    %c0_103 = arith.constant 0 : index
    %234 = vector.load %arg7[%c18, %c0_103] : memref<48x16xf32, #tpu.memory_space<vmem>>, vector<16x16xf32>
    %c18_104 = arith.constant 18 : index
    %c0_105 = arith.constant 0 : index
    %235 = vector.load %arg8[%c18_104, %c0_105] : memref<48x16xf32, #tpu.memory_space<vmem>>, vector<16x16xf32>
    %236 = arith.mulf %235, %32 : vector<16x16xf32>
    %cst_106 = arith.constant 6.62341309 : f32
    %237 = vector.broadcast %cst_106 : f32 to vector<16x16xf32>
    %238 = arith.mulf %234, %237 : vector<16x16xf32>
    %239 = arith.minimumf %236, %238 : vector<16x16xf32>
    %240 = arith.addf %229, %239 : vector<16x16xf32>
    %241 = arith.mulf %239, %239 : vector<16x16xf32>
    %242 = arith.addf %231, %241 : vector<16x16xf32>
    %243 = arith.mulf %234, %239 : vector<16x16xf32>
    %244 = arith.addf %233, %243 : vector<16x16xf32>
    %c19 = arith.constant 19 : index
    %c0_107 = arith.constant 0 : index
    %245 = vector.load %arg7[%c19, %c0_107] : memref<48x16xf32, #tpu.memory_space<vmem>>, vector<16x16xf32>
    %c19_108 = arith.constant 19 : index
    %c0_109 = arith.constant 0 : index
    %246 = vector.load %arg8[%c19_108, %c0_109] : memref<48x16xf32, #tpu.memory_space<vmem>>, vector<16x16xf32>
    %247 = arith.mulf %246, %32 : vector<16x16xf32>
    %cst_110 = arith.constant 6.62341309 : f32
    %248 = vector.broadcast %cst_110 : f32 to vector<16x16xf32>
    %249 = arith.mulf %245, %248 : vector<16x16xf32>
    %250 = arith.minimumf %247, %249 : vector<16x16xf32>
    %251 = arith.addf %240, %250 : vector<16x16xf32>
    %252 = arith.mulf %250, %250 : vector<16x16xf32>
    %253 = arith.addf %242, %252 : vector<16x16xf32>
    %254 = arith.mulf %245, %250 : vector<16x16xf32>
    %255 = arith.addf %244, %254 : vector<16x16xf32>
    %c20 = arith.constant 20 : index
    %c0_111 = arith.constant 0 : index
    %256 = vector.load %arg7[%c20, %c0_111] : memref<48x16xf32, #tpu.memory_space<vmem>>, vector<16x16xf32>
    %c20_112 = arith.constant 20 : index
    %c0_113 = arith.constant 0 : index
    %257 = vector.load %arg8[%c20_112, %c0_113] : memref<48x16xf32, #tpu.memory_space<vmem>>, vector<16x16xf32>
    %258 = arith.mulf %257, %32 : vector<16x16xf32>
    %cst_114 = arith.constant 6.62341309 : f32
    %259 = vector.broadcast %cst_114 : f32 to vector<16x16xf32>
    %260 = arith.mulf %256, %259 : vector<16x16xf32>
    %261 = arith.minimumf %258, %260 : vector<16x16xf32>
    %262 = arith.addf %251, %261 : vector<16x16xf32>
    %263 = arith.mulf %261, %261 : vector<16x16xf32>
    %264 = arith.addf %253, %263 : vector<16x16xf32>
    %265 = arith.mulf %256, %261 : vector<16x16xf32>
    %266 = arith.addf %255, %265 : vector<16x16xf32>
    %c21 = arith.constant 21 : index
    %c0_115 = arith.constant 0 : index
    %267 = vector.load %arg7[%c21, %c0_115] : memref<48x16xf32, #tpu.memory_space<vmem>>, vector<16x16xf32>
    %c21_116 = arith.constant 21 : index
    %c0_117 = arith.constant 0 : index
    %268 = vector.load %arg8[%c21_116, %c0_117] : memref<48x16xf32, #tpu.memory_space<vmem>>, vector<16x16xf32>
    %269 = arith.mulf %268, %32 : vector<16x16xf32>
    %cst_118 = arith.constant 6.62341309 : f32
    %270 = vector.broadcast %cst_118 : f32 to vector<16x16xf32>
    %271 = arith.mulf %267, %270 : vector<16x16xf32>
    %272 = arith.minimumf %269, %271 : vector<16x16xf32>
    %273 = arith.addf %262, %272 : vector<16x16xf32>
    %274 = arith.mulf %272, %272 : vector<16x16xf32>
    %275 = arith.addf %264, %274 : vector<16x16xf32>
    %276 = arith.mulf %267, %272 : vector<16x16xf32>
    %277 = arith.addf %266, %276 : vector<16x16xf32>
    %c22 = arith.constant 22 : index
    %c0_119 = arith.constant 0 : index
    %278 = vector.load %arg7[%c22, %c0_119] : memref<48x16xf32, #tpu.memory_space<vmem>>, vector<16x16xf32>
    %c22_120 = arith.constant 22 : index
    %c0_121 = arith.constant 0 : index
    %279 = vector.load %arg8[%c22_120, %c0_121] : memref<48x16xf32, #tpu.memory_space<vmem>>, vector<16x16xf32>
    %280 = arith.mulf %279, %32 : vector<16x16xf32>
    %cst_122 = arith.constant 6.62341309 : f32
    %281 = vector.broadcast %cst_122 : f32 to vector<16x16xf32>
    %282 = arith.mulf %278, %281 : vector<16x16xf32>
    %283 = arith.minimumf %280, %282 : vector<16x16xf32>
    %284 = arith.addf %273, %283 : vector<16x16xf32>
    %285 = arith.mulf %283, %283 : vector<16x16xf32>
    %286 = arith.addf %275, %285 : vector<16x16xf32>
    %287 = arith.mulf %278, %283 : vector<16x16xf32>
    %288 = arith.addf %277, %287 : vector<16x16xf32>
    %c23 = arith.constant 23 : index
    %c0_123 = arith.constant 0 : index
    %289 = vector.load %arg7[%c23, %c0_123] : memref<48x16xf32, #tpu.memory_space<vmem>>, vector<16x16xf32>
    %c23_124 = arith.constant 23 : index
    %c0_125 = arith.constant 0 : index
    %290 = vector.load %arg8[%c23_124, %c0_125] : memref<48x16xf32, #tpu.memory_space<vmem>>, vector<16x16xf32>
    %291 = arith.mulf %290, %32 : vector<16x16xf32>
    %cst_126 = arith.constant 6.62341309 : f32
    %292 = vector.broadcast %cst_126 : f32 to vector<16x16xf32>
    %293 = arith.mulf %289, %292 : vector<16x16xf32>
    %294 = arith.minimumf %291, %293 : vector<16x16xf32>
    %295 = arith.addf %284, %294 : vector<16x16xf32>
    %296 = arith.mulf %294, %294 : vector<16x16xf32>
    %297 = arith.addf %286, %296 : vector<16x16xf32>
    %298 = arith.mulf %289, %294 : vector<16x16xf32>
    %299 = arith.addf %288, %298 : vector<16x16xf32>
    %c24 = arith.constant 24 : index
    %c0_127 = arith.constant 0 : index
    %300 = vector.load %arg7[%c24, %c0_127] : memref<48x16xf32, #tpu.memory_space<vmem>>, vector<16x16xf32>
    %c24_128 = arith.constant 24 : index
    %c0_129 = arith.constant 0 : index
    %301 = vector.load %arg8[%c24_128, %c0_129] : memref<48x16xf32, #tpu.memory_space<vmem>>, vector<16x16xf32>
    %302 = arith.mulf %301, %32 : vector<16x16xf32>
    %cst_130 = arith.constant 6.62341309 : f32
    %303 = vector.broadcast %cst_130 : f32 to vector<16x16xf32>
    %304 = arith.mulf %300, %303 : vector<16x16xf32>
    %305 = arith.minimumf %302, %304 : vector<16x16xf32>
    %306 = arith.addf %295, %305 : vector<16x16xf32>
    %307 = arith.mulf %305, %305 : vector<16x16xf32>
    %308 = arith.addf %297, %307 : vector<16x16xf32>
    %309 = arith.mulf %300, %305 : vector<16x16xf32>
    %310 = arith.addf %299, %309 : vector<16x16xf32>
    %c25 = arith.constant 25 : index
    %c0_131 = arith.constant 0 : index
    %311 = vector.load %arg7[%c25, %c0_131] : memref<48x16xf32, #tpu.memory_space<vmem>>, vector<16x16xf32>
    %c25_132 = arith.constant 25 : index
    %c0_133 = arith.constant 0 : index
    %312 = vector.load %arg8[%c25_132, %c0_133] : memref<48x16xf32, #tpu.memory_space<vmem>>, vector<16x16xf32>
    %313 = arith.mulf %312, %32 : vector<16x16xf32>
    %cst_134 = arith.constant 6.62341309 : f32
    %314 = vector.broadcast %cst_134 : f32 to vector<16x16xf32>
    %315 = arith.mulf %311, %314 : vector<16x16xf32>
    %316 = arith.minimumf %313, %315 : vector<16x16xf32>
    %317 = arith.addf %306, %316 : vector<16x16xf32>
    %318 = arith.mulf %316, %316 : vector<16x16xf32>
    %319 = arith.addf %308, %318 : vector<16x16xf32>
    %320 = arith.mulf %311, %316 : vector<16x16xf32>
    %321 = arith.addf %310, %320 : vector<16x16xf32>
    %c26 = arith.constant 26 : index
    %c0_135 = arith.constant 0 : index
    %322 = vector.load %arg7[%c26, %c0_135] : memref<48x16xf32, #tpu.memory_space<vmem>>, vector<16x16xf32>
    %c26_136 = arith.constant 26 : index
    %c0_137 = arith.constant 0 : index
    %323 = vector.load %arg8[%c26_136, %c0_137] : memref<48x16xf32, #tpu.memory_space<vmem>>, vector<16x16xf32>
    %324 = arith.mulf %323, %32 : vector<16x16xf32>
    %cst_138 = arith.constant 6.62341309 : f32
    %325 = vector.broadcast %cst_138 : f32 to vector<16x16xf32>
    %326 = arith.mulf %322, %325 : vector<16x16xf32>
    %327 = arith.minimumf %324, %326 : vector<16x16xf32>
    %328 = arith.addf %317, %327 : vector<16x16xf32>
    %329 = arith.mulf %327, %327 : vector<16x16xf32>
    %330 = arith.addf %319, %329 : vector<16x16xf32>
    %331 = arith.mulf %322, %327 : vector<16x16xf32>
    %332 = arith.addf %321, %331 : vector<16x16xf32>
    %c27 = arith.constant 27 : index
    %c0_139 = arith.constant 0 : index
    %333 = vector.load %arg7[%c27, %c0_139] : memref<48x16xf32, #tpu.memory_space<vmem>>, vector<16x16xf32>
    %c27_140 = arith.constant 27 : index
    %c0_141 = arith.constant 0 : index
    %334 = vector.load %arg8[%c27_140, %c0_141] : memref<48x16xf32, #tpu.memory_space<vmem>>, vector<16x16xf32>
    %335 = arith.mulf %334, %32 : vector<16x16xf32>
    %cst_142 = arith.constant 6.62341309 : f32
    %336 = vector.broadcast %cst_142 : f32 to vector<16x16xf32>
    %337 = arith.mulf %333, %336 : vector<16x16xf32>
    %338 = arith.minimumf %335, %337 : vector<16x16xf32>
    %339 = arith.addf %328, %338 : vector<16x16xf32>
    %340 = arith.mulf %338, %338 : vector<16x16xf32>
    %341 = arith.addf %330, %340 : vector<16x16xf32>
    %342 = arith.mulf %333, %338 : vector<16x16xf32>
    %343 = arith.addf %332, %342 : vector<16x16xf32>
    %c28 = arith.constant 28 : index
    %c0_143 = arith.constant 0 : index
    %344 = vector.load %arg7[%c28, %c0_143] : memref<48x16xf32, #tpu.memory_space<vmem>>, vector<16x16xf32>
    %c28_144 = arith.constant 28 : index
    %c0_145 = arith.constant 0 : index
    %345 = vector.load %arg8[%c28_144, %c0_145] : memref<48x16xf32, #tpu.memory_space<vmem>>, vector<16x16xf32>
    %346 = arith.mulf %345, %32 : vector<16x16xf32>
    %cst_146 = arith.constant 6.62341309 : f32
    %347 = vector.broadcast %cst_146 : f32 to vector<16x16xf32>
    %348 = arith.mulf %344, %347 : vector<16x16xf32>
    %349 = arith.minimumf %346, %348 : vector<16x16xf32>
    %350 = arith.addf %339, %349 : vector<16x16xf32>
    %351 = arith.mulf %349, %349 : vector<16x16xf32>
    %352 = arith.addf %341, %351 : vector<16x16xf32>
    %353 = arith.mulf %344, %349 : vector<16x16xf32>
    %354 = arith.addf %343, %353 : vector<16x16xf32>
    %c29 = arith.constant 29 : index
    %c0_147 = arith.constant 0 : index
    %355 = vector.load %arg7[%c29, %c0_147] : memref<48x16xf32, #tpu.memory_space<vmem>>, vector<16x16xf32>
    %c29_148 = arith.constant 29 : index
    %c0_149 = arith.constant 0 : index
    %356 = vector.load %arg8[%c29_148, %c0_149] : memref<48x16xf32, #tpu.memory_space<vmem>>, vector<16x16xf32>
    %357 = arith.mulf %356, %32 : vector<16x16xf32>
    %cst_150 = arith.constant 6.62341309 : f32
    %358 = vector.broadcast %cst_150 : f32 to vector<16x16xf32>
    %359 = arith.mulf %355, %358 : vector<16x16xf32>
    %360 = arith.minimumf %357, %359 : vector<16x16xf32>
    %361 = arith.addf %350, %360 : vector<16x16xf32>
    %362 = arith.mulf %360, %360 : vector<16x16xf32>
    %363 = arith.addf %352, %362 : vector<16x16xf32>
    %364 = arith.mulf %355, %360 : vector<16x16xf32>
    %365 = arith.addf %354, %364 : vector<16x16xf32>
    %cst_151 = arith.constant 0.0333333351 : f32
    %366 = vector.broadcast %cst_151 : f32 to vector<16x16xf32>
    %367 = arith.mulf %23, %366 : vector<16x16xf32>
    %cst_152 = arith.constant 0.0333333351 : f32
    %368 = vector.broadcast %cst_152 : f32 to vector<16x16xf32>
    %369 = arith.mulf %361, %368 : vector<16x16xf32>
    %370 = arith.mulf %23, %369 : vector<16x16xf32>
    %371 = arith.subf %365, %370 : vector<16x16xf32>
    %372 = arith.mulf %23, %367 : vector<16x16xf32>
    %373 = arith.subf %25, %372 : vector<16x16xf32>
    %cst_153 = arith.constant 0.000000e+00 : f32
    %374 = vector.broadcast %cst_153 : f32 to vector<16x16xf32>
    %375 = arith.maximumf %373, %374 : vector<16x16xf32>
    %376 = arith.mulf %361, %369 : vector<16x16xf32>
    %377 = arith.subf %363, %376 : vector<16x16xf32>
    %cst_154 = arith.constant 0.000000e+00 : f32
    %378 = vector.broadcast %cst_154 : f32 to vector<16x16xf32>
    %379 = arith.maximumf %377, %378 : vector<16x16xf32>
    %380 = arith.mulf %375, %379 : vector<16x16xf32>
    %cst_155 = arith.constant 9.99999993E-9 : f32
    %381 = vector.broadcast %cst_155 : f32 to vector<16x16xf32>
    %382 = arith.addf %380, %381 : vector<16x16xf32>
    %383 = math.rsqrt %382 : vector<16x16xf32>
    %384 = arith.mulf %371, %383 : vector<16x16xf32>
    %385 = tpu.iota {dimensions = array<i32: 0>} : vector<16x16xi32>
    %c9_i32 = arith.constant 9 : i32
    %386 = vector.broadcast %c9_i32 : i32 to vector<16x16xi32>
    %387 = arith.cmpi slt, %385, %386 : vector<16x16xi32>
    %cst_156 = arith.constant 0.000000e+00 : f32
    %388 = vector.broadcast %cst_156 : f32 to vector<16x16xf32>
    %389 = arith.select %387, %384, %388 : vector<16x16xi1>, vector<16x16xf32>
    %c0_157 = arith.constant 0 : index
    %c0_158 = arith.constant 0 : index
    %390 = vector.load %arg5[%c0_157, %c0_158] : memref<16x128xf32, #tpu.memory_space<vmem>>, vector<16x128xf32>
    %cst_159 = arith.constant dense<0.000000e+00> : vector<16x128xf32>
    %391 = tpu.matmul %389, %390, %cst_159 {dimension_numbers = #tpu.dot_dimension_numbers<[1], [0], [0], [1], [0, 0, 1, 1], [], []>} : vector<16x16xf32>, vector<16x128xf32>, vector<16x128xf32> -> vector<16x128xf32>
    %cst_160 = arith.constant dense<0.000000e+00> : vector<128xf32>
    %392 = vector.multi_reduction <add>, %391, %cst_160 [0] : vector<16x128xf32> to vector<128xf32>
    %393 = vector.shape_cast %392 : vector<128xf32> to vector<1x128xf32>
    %cst_161 = arith.constant 0.00740740728 : f32
    %394 = vector.broadcast %cst_161 : f32 to vector<1x128xf32>
    %395 = arith.mulf %393, %394 : vector<1x128xf32>
    %396 = vector.shape_cast %395 : vector<1x128xf32> to vector<1x1x128xf32>
    %c0_162 = arith.constant 0 : index
    %c0_163 = arith.constant 0 : index
    %c0_164 = arith.constant 0 : index
    %397 = vector.load %arg6[%c0_162, %c0_163, %c0_164] : memref<1x1x128xf32, #tpu.memory_space<vmem>>, vector<1x1x128xf32>
    tpu.vector_store %arg6[%c0_162, %c0_163, %c0_164], %396 {strides = array<i32>} : memref<1x1x128xf32, #tpu.memory_space<vmem>>, vector<1x1x128xf32>,
    return
  }
  func.func @transform_0(%arg0: i32) -> (i32, i32, i32) {
    %c0_i32 = arith.constant 0 : i32
    %c0_i32_0 = arith.constant 0 : i32
    %c0_i32_1 = arith.constant 0 : i32
    return %arg0, %c0_i32, %c0_i32_0 : i32, i32, i32
  }
  func.func @transform_1(%arg0: i32) -> (i32, i32) {
    %c0_i32 = arith.constant 0 : i32
    %c0_i32_0 = arith.constant 0 : i32
    %c0_i32_1 = arith.constant 0 : i32
    return %c0_i32, %c0_i32_0 : i32, i32
  }
  func.func @transform_2(%arg0: i32) -> (i32, i32) {
    %c0_i32 = arith.constant 0 : i32
    %c0_i32_0 = arith.constant 0 : i32
    %c0_i32_1 = arith.constant 0 : i32
    return %c0_i32, %c0_i32_0 : i32, i32
  }
  func.func @transform_3(%arg0: i32) -> (i32, i32) {
    %c0_i32 = arith.constant 0 : i32
    %c0_i32_0 = arith.constant 0 : i32
    %c0_i32_1 = arith.constant 0 : i32
    return %c0_i32, %c0_i32_0 : i32, i32
  }
  func.func @transform_4(%arg0: i32) -> (i32, i32) {
    %c0_i32 = arith.constant 0 : i32
    %c0_i32_0 = arith.constant 0 : i32
    %c0_i32_1 = arith.constant 0 : i32
    return %c0_i32, %c0_i32_0 : i32, i32
  }
  func.func @transform_5(%arg0: i32) -> (i32, i32, i32) {
    %c0_i32 = arith.constant 0 : i32
    %c0_i32_0 = arith.constant 0 : i32
    %c0_i32_1 = arith.constant 0 : i32
    return %arg0, %c0_i32, %c0_i32_0 : i32, i32, i32
  }
}

</mosaic_0001>

<llo_original>
// kernel: tpu_custom_call.1
$region0: #{tpu_custom_call.1}
  #allocation0 [shape = 'u32[]', space=smem, size = 0x4, offset = 0x4, fixed_abs, tag = 'smem constant byte address 0x4 - core index']
  #allocation1 [shape = 'u32[144,128]{1,0:T(1,128)}', space=vmem, size = 0x12000, scoped, tag = 'internal scratch']
  #allocation2 [shape = 'f32[48,16]{1,0:T(8,128)}', space=vmem, size = 0x6000, scoped, tag = 'scratch operand']
  #allocation3 [shape = 'f32[48,16]{1,0:T(8,128)}', space=vmem, size = 0x6000, scoped, tag = 'scratch operand']
  %s0 = inlined_call_operand.vmem [shape: bf16[2,80,256], index: 0, kind: input, shape index: {}]
  %s1 = inlined_call_operand.hbm [shape: bf16[256,512], index: 1, kind: input, shape index: {}]
  %s2 = inlined_call_operand.vmem [shape: f32[256,16], index: 2, kind: input, shape index: {}]
  %s3 = inlined_call_operand.vmem [shape: f32[16,40], index: 3, kind: input, shape index: {}]
  %s4 = inlined_call_operand.vmem [shape: f32[16,128], index: 4, kind: input, shape index: {}]
  %s5 = inlined_call_operand.hbm [shape: f32[2,1,128], index: 5, kind: output, shape index: {}]
  %s6 = sld [smem:[#allocation0]]
  $region57: #{tpu_custom_call.1} parent=0
    _
  %s8 = ssub.s32 1, %s6
  %s9 = scalar_select 0, %s8, %s6
  $region1: #{tpu_custom_call.1} parent=0
    #allocation4 [shape = 'u8[262144]{0}', space=vmem, size = 0x40000, scoped, tag = 'input window, operand 1, single buffered']
    #allocation5 [shape = 's32[2]{0}', space=sflag, size = 0x8, scoped, tag = 'scoped memory for tpu_custom_call.1']
    #allocation6 [shape = 's32[2]{0}', space=sflag, size = 0x8, scoped, tag = 'scoped memory for tpu_custom_call.1']
    #allocation7 [shape = 'u8[1024]{0}', space=vmem, size = 0x400, scoped, tag = 'output window, operand 0']
    %10 = vsyncpa [#allocation5], 0
    %11 = vsyncpa [#allocation6], 0
    %s12 = scalar_lea.sflag [#allocation6], 1
    %13 = vsyncpa %s12, 0
    loop: start=0, step=1, limit=4
    $region2: #{tpu_custom_call.1} parent=1 // loop_pre_header
      _
    $region3: #{tpu_custom_call.1} parent=1 // loop_header
      %s15 = sphi 0, %s19
      %p16 = scmp.ge.s32.totalorder %s15, 4
      %s25 = sphi 0, %s27
      %s28 = sphi 0, %s25
      %s29 = sphi 0, %s28
      %s45 = sphi 0, %s29
      %s49 = sphi 0, %s49
      %s51 = sphi 0, %s49
      %s52 = sphi 0, %s51
      %s66 = sphi 0, %s52
      %s70 = sphi 0, %s70
      %s72 = sphi 0, %s70
      %s73 = sphi 0, %s72
      %s87 = sphi 0, %s73
      %s91 = sphi 0, %s91
      %s93 = sphi 0, %s91
      %s94 = sphi 0, %s93
      %s108 = sphi 0, %s94
      %s112 = sphi 0, %s112
      %s114 = sphi 0, %s112
      %s115 = sphi 0, %s114
      %s129 = sphi 0, %s115
      %s135 = sphi 0, %s137
      %s138 = sphi 0, %s135
      %s139 = sphi 0, %s138
      %s155 = sphi 0, %s139
    $region4: #{tpu_custom_call.1} parent=1 // loop_header_branch
      %18 = sbr.rel (%p16) target = $region8
    $region5: #{tpu_custom_call.1} parent=1 // loop_body
      %s20 = ssub.s32 %s15, 1
      %s21 = ssub.s32 %s15, 2
      %s22 = sadd.s32 %s15, 1
      %s23 = ssub.s32 %s15, %s22
      %p24 = scmp.eq.s32.totalorder %s23, 0
      %s26 = sadd.s32 %s25, 1
      %s27 = scalar_select %p24, %s25, %s26
      %p30 = pneg %p24
      %p31 = scmp.eq.s32.totalorder %s15, 1
      %p32 = por %p30, %p31
      %p33 = scmp.ne.s32.totalorder %s25, %s28
      %p34 = scmp.eq.s32.totalorder %s15, 0
      %p35 = por %p33, %p34
      %p36 = scmp.ne.s32.totalorder %s25, %s28
      %p37 = scmp.eq.s32.totalorder %s20, 1
      %p38 = por %p36, %p37
      %p39 = scmp.ne.s32.totalorder %s28, %s29
      %p40 = scmp.eq.s32.totalorder %s20, 0
      %p41 = por %p39, %p40
      %p42 = scmp.ne.s32.totalorder %s28, %s29
      %p43 = scmp.eq.s32.totalorder %s21, 1
      %p44 = por %p42, %p43
      %p46 = scmp.ne.s32.totalorder %s29, %s45
      %p47 = scmp.eq.s32.totalorder %s21, 0
      %p48 = por %p46, %p47
      %s50 = sadd.s32 %s49, 1
      %p53 = scmp.eq.s32.totalorder %s15, 1
      %p54 = scmp.ne.s32.totalorder %s49, %s51
      %p55 = scmp.eq.s32.totalorder %s15, 0
      %p56 = por %p54, %p55
      %p57 = scmp.ne.s32.totalorder %s49, %s51
      %p58 = scmp.eq.s32.totalorder %s20, 1
      %p59 = por %p57, %p58
      %p60 = scmp.ne.s32.totalorder %s51, %s52
      %p61 = scmp.eq.s32.totalorder %s20, 0
      %p62 = por %p60, %p61
      %p63 = scmp.ne.s32.totalorder %s51, %s52
      %p64 = scmp.eq.s32.totalorder %s21, 1
      %p65 = por %p63, %p64
      %p67 = scmp.ne.s32.totalorder %s52, %s66
      %p68 = scmp.eq.s32.totalorder %s21, 0
      %p69 = por %p67, %p68
      %s71 = sadd.s32 %s70, 1
      %p74 = scmp.eq.s32.totalorder %s15, 1
      %p75 = scmp.ne.s32.totalorder %s70, %s72
      %p76 = scmp.eq.s32.totalorder %s15, 0
      %p77 = por %p75, %p76
      %p78 = scmp.ne.s32.totalorder %s70, %s72
      %p79 = scmp.eq.s32.totalorder %s20, 1
      %p80 = por %p78, %p79
      %p81 = scmp.ne.s32.totalorder %s72, %s73
      %p82 = scmp.eq.s32.totalorder %s20, 0
      %p83 = por %p81, %p82
      %p84 = scmp.ne.s32.totalorder %s72, %s73
      %p85 = scmp.eq.s32.totalorder %s21, 1
      %p86 = por %p84, %p85
      %p88 = scmp.ne.s32.totalorder %s73, %s87
      %p89 = scmp.eq.s32.totalorder %s21, 0
      %p90 = por %p88, %p89
      %s92 = sadd.s32 %s91, 1
      %p95 = scmp.eq.s32.totalorder %s15, 1
      %p96 = scmp.ne.s32.totalorder %s91, %s93
      %p97 = scmp.eq.s32.totalorder %s15, 0
      %p98 = por %p96, %p97
      %p99 = scmp.ne.s32.totalorder %s91, %s93
      %p100 = scmp.eq.s32.totalorder %s20, 1
      %p101 = por %p99, %p100
      %p102 = scmp.ne.s32.totalorder %s93, %s94
      %p103 = scmp.eq.s32.totalorder %s20, 0
      %p104 = por %p102, %p103
      %p105 = scmp.ne.s32.totalorder %s93, %s94
      %p106 = scmp.eq.s32.totalorder %s21, 1
      %p107 = por %p105, %p106
      %p109 = scmp.ne.s32.totalorder %s94, %s108
      %p110 = scmp.eq.s32.totalorder %s21, 0
      %p111 = por %p109, %p110
      %s113 = sadd.s32 %s112, 1
      %p116 = scmp.eq.s32.totalorder %s15, 1
      %p117 = scmp.ne.s32.totalorder %s112, %s114
      %p118 = scmp.eq.s32.totalorder %s15, 0
      %p119 = por %p117, %p118
      %p120 = scmp.ne.s32.totalorder %s112, %s114
      %p121 = scmp.eq.s32.totalorder %s20, 1
      %p122 = por %p120, %p121
      %p123 = scmp.ne.s32.totalorder %s114, %s115
      %p124 = scmp.eq.s32.totalorder %s20, 0
      %p125 = por %p123, %p124
      %p126 = scmp.ne.s32.totalorder %s114, %s115
      %p127 = scmp.eq.s32.totalorder %s21, 1
      %p128 = por %p126, %p127
      %p130 = scmp.ne.s32.totalorder %s115, %s129
      %p131 = scmp.eq.s32.totalorder %s21, 0
      %p132 = por %p130, %p131
      %s133 = ssub.s32 %s15, %s22
      %p134 = scmp.eq.s32.totalorder %s133, 0
      %s136 = sadd.s32 %s135, 1
      %s137 = scalar_select %p134, %s135, %s136
      %p140 = pneg %p134
      %p141 = scmp.eq.s32.totalorder %s15, 1
      %p142 = por %p140, %p141
      %p143 = scmp.ne.s32.totalorder %s135, %s138
      %p144 = scmp.eq.s32.totalorder %s15, 0
      %p145 = por %p143, %p144
      %p146 = scmp.ne.s32.totalorder %s135, %s138
      %p147 = scmp.eq.s32.totalorder %s20, 1
      %p148 = por %p146, %p147
      %p149 = scmp.ne.s32.totalorder %s138, %s139
      %p150 = scmp.eq.s32.totalorder %s20, 0
      %p151 = por %p149, %p150
      %p152 = scmp.ne.s32.totalorder %s138, %s139
      %p153 = scmp.eq.s32.totalorder %s21, 1
      %p154 = por %p152, %p153
      %p156 = scmp.ne.s32.totalorder %s139, %s155
      %p157 = scmp.eq.s32.totalorder %s21, 0
      %p158 = por %p156, %p157
      %p159 = scmp.le.s32.totalorder 1, %s15
      %p160 = scmp.lt.s32.totalorder %s15, 3
      %p161 = pnand %p159, %p160
      %p162 = pneg %p161
      // Predicated region
      $region9: #{tpu_custom_call.1} parent=5 // pred_check
        _
      $region10: #{tpu_custom_call.1} parent=5 // pred_check_branch
        %164 = sbr.rel (%p161) target = $region12
      $region11: #{tpu_custom_call.1} parent=5 // pred_region
        %s165 = ssub.s32 %s15, 1
        // Predicated region
        $region13: #{tpu_custom_call.1} parent=11 // pred_check
          %p166 = pneg %p62
        $region14: #{tpu_custom_call.1} parent=11 // pred_check_branch
          %168 = sbr.rel (%p166) target = $region16
        $region15: #{tpu_custom_call.1} parent=11 // pred_region
          %s170 = ssub.s32 8192, 8192
          %171 = vsyncadd [#allocation5], %s170
          %s172 = sshll.u32 [#allocation4], 4
          %s173 = int_to_ptr.vmem [resolvable:$true] %s172
          %178 = dma.hbm_to_vmem [thread:$0]  %s1, 8192, %s173, [#allocation5], 256, 256, 16
        $region16: #{tpu_custom_call.1} parent=11 // pred_fallthru
          _
        // Predicated region
        $region17: #{tpu_custom_call.1} parent=11 // pred_check
          %p179 = pneg %p83
        $region18: #{tpu_custom_call.1} parent=11 // pred_check_branch
          %181 = sbr.rel (%p179) target = $region20
        $region19: #{tpu_custom_call.1} parent=11 // pred_region
          _
        $region20: #{tpu_custom_call.1} parent=11 // pred_fallthru
          _
        // Predicated region
        $region21: #{tpu_custom_call.1} parent=11 // pred_check
          %p182 = pneg %p104
        $region22: #{tpu_custom_call.1} parent=11 // pred_check_branch
          %184 = sbr.rel (%p182) target = $region24
        $region23: #{tpu_custom_call.1} parent=11 // pred_region
          _
        $region24: #{tpu_custom_call.1} parent=11 // pred_fallthru
          _
        // Predicated region
        $region25: #{tpu_custom_call.1} parent=11 // pred_check
          %p185 = pneg %p125
        $region26: #{tpu_custom_call.1} parent=11 // pred_check_branch
          %187 = sbr.rel (%p185) target = $region28
        $region27: #{tpu_custom_call.1} parent=11 // pred_region
          _
        $region28: #{tpu_custom_call.1} parent=11 // pred_fallthru
          _
      $region12: #{tpu_custom_call.1} parent=5 // pred_fallthru
        _
      %p188 = scmp.lt.s32.totalorder %s15, 2
      // Predicated region
      $region29: #{tpu_custom_call.1} parent=5 // pred_check
        %p189 = pneg %p188
      $region30: #{tpu_custom_call.1} parent=5 // pred_check_branch
        %191 = sbr.rel (%p189) target = $region32
      $region31: #{tpu_custom_call.1} parent=5 // pred_region
        // Predicated region
        $region33: #{tpu_custom_call.1} parent=31 // pred_check
          %p192 = pneg %p35
        $region34: #{tpu_custom_call.1} parent=31 // pred_check_branch
          %194 = sbr.rel (%p192) target = $region36
        $region35: #{tpu_custom_call.1} parent=31 // pred_region
          %p195 = scmp.lt.s32.totalorder %s15, 1
          %s196 = scalar_select %p195, %s15, 1
          %s197 = smul.addr %s196, 20
          %s198 = smul.addr %s197, 4
          %s199 = scalar_lea.vmem %s0, %s198
        $region36: #{tpu_custom_call.1} parent=31 // pred_fallthru
          _
      $region32: #{tpu_custom_call.1} parent=5 // pred_fallthru
        _
      %p200 = scmp.le.s32.totalorder 1, %s15
      %p201 = scmp.lt.s32.totalorder %s15, 3
      %p202 = pnand %p200, %p201
      %p203 = pneg %p202
      // Predicated region
      $region37: #{tpu_custom_call.1} parent=5 // pred_check
        _
      $region38: #{tpu_custom_call.1} parent=5 // pred_check_branch
        %205 = sbr.rel (%p202) target = $region40
      $region39: #{tpu_custom_call.1} parent=5 // pred_region
        %s206 = ssub.s32 %s15, 1
        // Predicated region
        $region41: #{tpu_custom_call.1} parent=39 // pred_check
          %p207 = pneg %p62
        $region42: #{tpu_custom_call.1} parent=39 // pred_check_branch
          %209 = sbr.rel (%p207) target = $region44
        $region43: #{tpu_custom_call.1} parent=39 // pred_region
          %210 = dma.done [#allocation5], 8192
        $region44: #{tpu_custom_call.1} parent=39 // pred_fallthru
          _
        %p211 = scmp.lt.s32.totalorder %s20, 1
        %s212 = scalar_select %p211, %s20, 1
        %s213 = smul.addr %s212, 20
        %s214 = smul.addr %s213, 4
        %s215 = scalar_lea.vmem %s0, %s214
        %p216 = pneg %p41
        %p217 = pneg %p38
        %p218 = pneg %p62
        %p219 = pneg %p59
        %p220 = pneg %p83
        %p221 = pneg %p80
        %p222 = pneg %p104
        %p223 = pneg %p101
        %p224 = pneg %p125
        %p225 = pneg %p122
        %p226 = pneg %p151
        %p227 = pneg %p148
        %s228 = sand.u32 %s138, 1
        %s229 = scalar_lea.sflag [#allocation6], %s228
        %s230 = sand.u32 %s138, 1
        %s231 = scalar_lea.vmem [#allocation7], %s230
        %p232 = scmp.lt.s32.totalorder %s20, 1
        %s233 = scalar_select %p232, %s20, 1
        %s234 = smul.addr %s233, 20
        %s235 = smul.addr %s234, 4
        %s236 = scalar_lea.vmem %s0, %s235
        %vm237 = vcmask 130048
        %238 = vst.msk [vmem:[#allocation2] sm:$0xff] %vm237, 0.0
        %239 = vst.msk [vmem:[#allocation2 + $0x8] sm:$0xff] %vm237, 0.0
        %240 = vst.msk [vmem:[#allocation2 + $0x10] sm:$0xff] %vm237, 0.0
        %241 = vst.msk [vmem:[#allocation2 + $0x18] sm:$0xff] %vm237, 0.0
        %242 = vst.msk [vmem:[#allocation2 + $0x20] sm:$0xff] %vm237, 0.0
        %243 = vst.msk [vmem:[#allocation2 + $0x28] sm:$0xff] %vm237, 0.0
        %244 = vst.msk [vmem:[#allocation3] sm:$0xff] %vm237, 0.0
        %245 = vst.msk [vmem:[#allocation3 + $0x8] sm:$0xff] %vm237, 0.0
        %246 = vst.msk [vmem:[#allocation3 + $0x10] sm:$0xff] %vm237, 0.0
        %247 = vst.msk [vmem:[#allocation3 + $0x18] sm:$0xff] %vm237, 0.0
        %248 = vst.msk [vmem:[#allocation3 + $0x20] sm:$0xff] %vm237, 0.0
        %249 = vst.msk [vmem:[#allocation3 + $0x28] sm:$0xff] %vm237, 0.0
        %v250 = vld [vmem:[%s236] sm:$0xff]
        %v251 = vld [vmem:[%s236 + $0x8] sm:$0xff]
        %v252 = vld [vmem:[%s236 + $0x10] sm:$0xff]
        %v253 = vld [vmem:[%s236 + $0x18] sm:$0xff]
        %v254 = vld [vmem:[%s236 + $0x20] sm:$0xff]
        %v255 = vld [vmem:[%s236 + $0x28] sm:$0xff]
        %v256 = vld [vmem:[%s236 + $0x30] sm:$0xff]
        %v257 = vld [vmem:[%s236 + $0x38] sm:$0xff]
        %v258 = vld [vmem:[%s236 + $0x40] sm:$0xff]
        %v259 = vld [vmem:[%s236 + $0x48] sm:$0xff]
        %v260 = vld [vmem:[#allocation4] sm:$0xff]
        %v261 = vld [vmem:[#allocation4 + $0x8] sm:$0xff]
        %v262 = vld [vmem:[#allocation4 + $0x10] sm:$0xff]
        %v263 = vld [vmem:[#allocation4 + $0x18] sm:$0xff]
        %v264 = vld [vmem:[#allocation4 + $0x20] sm:$0xff]
        %v265 = vld [vmem:[#allocation4 + $0x28] sm:$0xff]
        %v266 = vld [vmem:[#allocation4 + $0x30] sm:$0xff]
        %v267 = vld [vmem:[#allocation4 + $0x38] sm:$0xff]
        %v268 = vld [vmem:[#allocation4 + $0x40] sm:$0xff]
        %v269 = vld [vmem:[#allocation4 + $0x48] sm:$0xff]
        %v270 = vld [vmem:[#allocation4 + $0x50] sm:$0xff]
        %v271 = vld [vmem:[#allocation4 + $0x58] sm:$0xff]
        %v272 = vld [vmem:[#allocation4 + $0x60] sm:$0xff]
        %v273 = vld [vmem:[#allocation4 + $0x68] sm:$0xff]
        %v274 = vld [vmem:[#allocation4 + $0x70] sm:$0xff]
        %v275 = vld [vmem:[#allocation4 + $0x78] sm:$0xff]
        %v276 = vld [vmem:[#allocation4 + $0x80] sm:$0xff]
        %v277 = vld [vmem:[#allocation4 + $0x88] sm:$0xff]
        %v278 = vld [vmem:[#allocation4 + $0x90] sm:$0xff]
        %v279 = vld [vmem:[#allocation4 + $0x98] sm:$0xff]
        %v280 = vld [vmem:[#allocation4 + $0xa0] sm:$0xff]
        %v281 = vld [vmem:[#allocation4 + $0xa8] sm:$0xff]
        %v282 = vld [vmem:[#allocation4 + $0xb0] sm:$0xff]
        %v283 = vld [vmem:[#allocation4 + $0xb8] sm:$0xff]
        %v284 = vld [vmem:[#allocation4 + $0xc0] sm:$0xff]
        %v285 = vld [vmem:[#allocation4 + $0xc8] sm:$0xff]
        %v286 = vld [vmem:[#allocation4 + $0xd0] sm:$0xff]
        %v287 = vld [vmem:[#allocation4 + $0xd8] sm:$0xff]
        %v288 = vld [vmem:[#allocation4 + $0xe0] sm:$0xff]
        %v289 = vld [vmem:[#allocation4 + $0xe8] sm:$0xff]
        %v290 = vld [vmem:[#allocation4 + $0xf0] sm:$0xff]
        %v291 = vld [vmem:[#allocation4 + $0xf8] sm:$0xff]
        %v292 = vld [vmem:[#allocation4 + $0x100] sm:$0xff]
        %v293 = vld [vmem:[#allocation4 + $0x108] sm:$0xff]
        %v294 = vld [vmem:[#allocation4 + $0x110] sm:$0xff]
        %v295 = vld [vmem:[#allocation4 + $0x118] sm:$0xff]
        %v296 = vld [vmem:[#allocation4 + $0x120] sm:$0xff]
        %v297 = vld [vmem:[#allocation4 + $0x128] sm:$0xff]
        %v298 = vld [vmem:[#allocation4 + $0x130] sm:$0xff]
        %v299 = vld [vmem:[#allocation4 + $0x138] sm:$0xff]
        %v300 = vld [vmem:[#allocation4 + $0x140] sm:$0xff]
        %v301 = vld [vmem:[#allocation4 + $0x148] sm:$0xff]
        %v302 = vld [vmem:[#allocation4 + $0x150] sm:$0xff]
        %v303 = vld [vmem:[#allocation4 + $0x158] sm:$0xff]
        %v304 = vld [vmem:[#allocation4 + $0x160] sm:$0xff]
        %v305 = vld [vmem:[#allocation4 + $0x168] sm:$0xff]
        %v306 = vld [vmem:[#allocation4 + $0x170] sm:$0xff]
        %v307 = vld [vmem:[#allocation4 + $0x178] sm:$0xff]
        %v308 = vld [vmem:[#allocation4 + $0x180] sm:$0xff]
        %v309 = vld [vmem:[#allocation4 + $0x188] sm:$0xff]
        %v310 = vld [vmem:[#allocation4 + $0x190] sm:$0xff]
        %v311 = vld [vmem:[#allocation4 + $0x198] sm:$0xff]
        %v312 = vld [vmem:[#allocation4 + $0x1a0] sm:$0xff]
        %v313 = vld [vmem:[#allocation4 + $0x1a8] sm:$0xff]
        %v314 = vld [vmem:[#allocation4 + $0x1b0] sm:$0xff]
        %v315 = vld [vmem:[#allocation4 + $0x1b8] sm:$0xff]
        %v316 = vld [vmem:[#allocation4 + $0x1c0] sm:$0xff]
        %v317 = vld [vmem:[#allocation4 + $0x1c8] sm:$0xff]
        %v318 = vld [vmem:[#allocation4 + $0x1d0] sm:$0xff]
        %v319 = vld [vmem:[#allocation4 + $0x1d8] sm:$0xff]
        %v320 = vld [vmem:[#allocation4 + $0x1e0] sm:$0xff]
        %v321 = vld [vmem:[#allocation4 + $0x1e8] sm:$0xff]
        %v322 = vld [vmem:[#allocation4 + $0x1f0] sm:$0xff]
        %v323 = vld [vmem:[#allocation4 + $0x1f8] sm:$0xff]
        %v334 = vunpack.c.l.b16 %v250
        %v335 = vunpack.c.h.b16 %v250
        %v336 = vunpack.c.l.b16 %v251
        %v337 = vunpack.c.h.b16 %v251
        %v338 = vunpack.c.l.b16 %v252
        %v339 = vunpack.c.h.b16 %v252
        %v340 = vunpack.c.l.b16 %v253
        %v341 = vunpack.c.h.b16 %v253
        %v342 = vunpack.c.l.b16 %v254
        %v343 = vunpack.c.h.b16 %v254
        %v344 = vunpack.c.l.b16 %v255
        %v345 = vunpack.c.h.b16 %v255
        %v346 = vunpack.c.l.b16 %v256
        %v347 = vunpack.c.h.b16 %v256
        %v348 = vunpack.c.l.b16 %v257
        %v349 = vunpack.c.h.b16 %v257
        %v350 = vunpack.c.l.b16 %v258
        %v351 = vunpack.c.h.b16 %v258
        %v352 = vunpack.c.l.b16 %v259
        %v353 = vunpack.c.h.b16 %v259
        %v354 = vpack.c.b16 %v336, %v334
        %v355 = vpack.c.b16 %v337, %v335
        %v356 = vpack.c.b16 %v340, %v338
        %v357 = vpack.c.b16 %v341, %v339
        %v358 = vpack.c.b16 %v344, %v342
        %v359 = vpack.c.b16 %v345, %v343
        %v360 = vpack.c.b16 %v348, %v346
        %v361 = vpack.c.b16 %v349, %v347
        %v362 = vpack.c.b16 %v352, %v350
        %v363 = vpack.c.b16 %v353, %v351
        %v438 = vunpack.c.l.b16 %v260
        %v439 = vunpack.c.h.b16 %v260
        %v440 = vunpack.c.l.b16 %v261
        %v441 = vunpack.c.h.b16 %v261
        %v442 = vunpack.c.l.b16 %v262
        %v443 = vunpack.c.h.b16 %v262
        %v444 = vunpack.c.l.b16 %v263
        %v445 = vunpack.c.h.b16 %v263
        %v446 = vunpack.c.l.b16 %v264
        %v447 = vunpack.c.h.b16 %v264
        %v448 = vunpack.c.l.b16 %v265
        %v449 = vunpack.c.h.b16 %v265
        %v450 = vunpack.c.l.b16 %v266
        %v451 = vunpack.c.h.b16 %v266
        %v452 = vunpack.c.l.b16 %v267
        %v453 = vunpack.c.h.b16 %v267
        %v454 = vunpack.c.l.b16 %v268
        %v455 = vunpack.c.h.b16 %v268
        %v456 = vunpack.c.l.b16 %v269
        %v457 = vunpack.c.h.b16 %v269
        %v458 = vunpack.c.l.b16 %v270
        %v459 = vunpack.c.h.b16 %v270
        %v460 = vunpack.c.l.b16 %v271
        %v461 = vunpack.c.h.b16 %v271
        %v462 = vunpack.c.l.b16 %v272
        %v463 = vunpack.c.h.b16 %v272
        %v464 = vunpack.c.l.b16 %v273
        %v465 = vunpack.c.h.b16 %v273
        %v466 = vunpack.c.l.b16 %v274
        %v467 = vunpack.c.h.b16 %v274
        %v468 = vunpack.c.l.b16 %v275
        %v469 = vunpack.c.h.b16 %v275
        %v470 = vunpack.c.l.b16 %v276
        %v471 = vunpack.c.h.b16 %v276
        %v472 = vunpack.c.l.b16 %v277
        %v473 = vunpack.c.h.b16 %v277
        %v474 = vunpack.c.l.b16 %v278
        %v475 = vunpack.c.h.b16 %v278
        %v476 = vunpack.c.l.b16 %v279
        %v477 = vunpack.c.h.b16 %v279
        %v478 = vunpack.c.l.b16 %v280
        %v479 = vunpack.c.h.b16 %v280
        %v480 = vunpack.c.l.b16 %v281
        %v481 = vunpack.c.h.b16 %v281
        %v482 = vunpack.c.l.b16 %v282
        %v483 = vunpack.c.h.b16 %v282
        %v484 = vunpack.c.l.b16 %v283
        %v485 = vunpack.c.h.b16 %v283
        %v486 = vunpack.c.l.b16 %v284
        %v487 = vunpack.c.h.b16 %v284
        %v488 = vunpack.c.l.b16 %v285
        %v489 = vunpack.c.h.b16 %v285
        %v490 = vunpack.c.l.b16 %v286
        %v491 = vunpack.c.h.b16 %v286
        %v492 = vunpack.c.l.b16 %v287
        %v493 = vunpack.c.h.b16 %v287
        %v494 = vunpack.c.l.b16 %v288
        %v495 = vunpack.c.h.b16 %v288
        %v496 = vunpack.c.l.b16 %v289
        %v497 = vunpack.c.h.b16 %v289
        %v498 = vunpack.c.l.b16 %v290
        %v499 = vunpack.c.h.b16 %v290
        %v500 = vunpack.c.l.b16 %v291
        %v501 = vunpack.c.h.b16 %v291
        %v502 = vunpack.c.l.b16 %v292
        %v503 = vunpack.c.h.b16 %v292
        %v504 = vunpack.c.l.b16 %v293
        %v505 = vunpack.c.h.b16 %v293
        %v506 = vunpack.c.l.b16 %v294
        %v507 = vunpack.c.h.b16 %v294
        %v508 = vunpack.c.l.b16 %v295
        %v509 = vunpack.c.h.b16 %v295
        %v510 = vunpack.c.l.b16 %v296
        %v511 = vunpack.c.h.b16 %v296
        %v512 = vunpack.c.l.b16 %v297
        %v513 = vunpack.c.h.b16 %v297
        %v514 = vunpack.c.l.b16 %v298
        %v515 = vunpack.c.h.b16 %v298
        %v516 = vunpack.c.l.b16 %v299
        %v517 = vunpack.c.h.b16 %v299
        %v518 = vunpack.c.l.b16 %v300
        %v519 = vunpack.c.h.b16 %v300
        %v520 = vunpack.c.l.b16 %v301
        %v521 = vunpack.c.h.b16 %v301
        %v522 = vunpack.c.l.b16 %v302
        %v523 = vunpack.c.h.b16 %v302
        %v524 = vunpack.c.l.b16 %v303
        %v525 = vunpack.c.h.b16 %v303
        %v526 = vunpack.c.l.b16 %v304
        %v527 = vunpack.c.h.b16 %v304
        %v528 = vunpack.c.l.b16 %v305
        %v529 = vunpack.c.h.b16 %v305
        %v530 = vunpack.c.l.b16 %v306
        %v531 = vunpack.c.h.b16 %v306
        %v532 = vunpack.c.l.b16 %v307
        %v533 = vunpack.c.h.b16 %v307
        %v534 = vunpack.c.l.b16 %v308
        %v535 = vunpack.c.h.b16 %v308
        %v536 = vunpack.c.l.b16 %v309
        %v537 = vunpack.c.h.b16 %v309
        %v538 = vunpack.c.l.b16 %v310
        %v539 = vunpack.c.h.b16 %v310
        %v540 = vunpack.c.l.b16 %v311
        %v541 = vunpack.c.h.b16 %v311
        %v542 = vunpack.c.l.b16 %v312
        %v543 = vunpack.c.h.b16 %v312
        %v544 = vunpack.c.l.b16 %v313
        %v545 = vunpack.c.h.b16 %v313
        %v546 = vunpack.c.l.b16 %v314
        %v547 = vunpack.c.h.b16 %v314
        %v548 = vunpack.c.l.b16 %v315
        %v549 = vunpack.c.h.b16 %v315
        %v550 = vunpack.c.l.b16 %v316
        %v551 = vunpack.c.h.b16 %v316
        %v552 = vunpack.c.l.b16 %v317
        %v553 = vunpack.c.h.b16 %v317
        %v554 = vunpack.c.l.b16 %v318
        %v555 = vunpack.c.h.b16 %v318
        %v556 = vunpack.c.l.b16 %v319
        %v557 = vunpack.c.h.b16 %v319
        %v558 = vunpack.c.l.b16 %v320
        %v559 = vunpack.c.h.b16 %v320
        %v560 = vunpack.c.l.b16 %v321
        %v561 = vunpack.c.h.b16 %v321
        %v562 = vunpack.c.l.b16 %v322
        %v563 = vunpack.c.h.b16 %v322
        %v564 = vunpack.c.l.b16 %v323
        %v565 = vunpack.c.h.b16 %v323
        %v566 = vpack.c.b16 %v442, %v438
        %v567 = vpack.c.b16 %v443, %v439
        %v568 = vpack.c.b16 %v444, %v440
        %v569 = vpack.c.b16 %v445, %v441
        %v570 = vpack.c.b16 %v450, %v446
        %v571 = vpack.c.b16 %v451, %v447
        %v572 = vpack.c.b16 %v452, %v448
        %v573 = vpack.c.b16 %v453, %v449
        %v574 = vpack.c.b16 %v458, %v454
        %v575 = vpack.c.b16 %v459, %v455
        %v576 = vpack.c.b16 %v460, %v456
        %v577 = vpack.c.b16 %v461, %v457
        %v578 = vpack.c.b16 %v466, %v462
        %v579 = vpack.c.b16 %v467, %v463
        %v580 = vpack.c.b16 %v468, %v464
        %v581 = vpack.c.b16 %v469, %v465
        %v582 = vpack.c.b16 %v474, %v470
        %v583 = vpack.c.b16 %v475, %v471
        %v584 = vpack.c.b16 %v476, %v472
        %v585 = vpack.c.b16 %v477, %v473
        %v586 = vpack.c.b16 %v482, %v478
        %v587 = vpack.c.b16 %v483, %v479
        %v588 = vpack.c.b16 %v484, %v480
        %v589 = vpack.c.b16 %v485, %v481
        %v590 = vpack.c.b16 %v490, %v486
        %v591 = vpack.c.b16 %v491, %v487
        %v592 = vpack.c.b16 %v492, %v488
        %v593 = vpack.c.b16 %v493, %v489
        %v594 = vpack.c.b16 %v498, %v494
        %v595 = vpack.c.b16 %v499, %v495
        %v596 = vpack.c.b16 %v500, %v496
        %v597 = vpack.c.b16 %v501, %v497
        %v598 = vpack.c.b16 %v506, %v502
        %v599 = vpack.c.b16 %v507, %v503
        %v600 = vpack.c.b16 %v508, %v504
        %v601 = vpack.c.b16 %v509, %v505
        %v602 = vpack.c.b16 %v514, %v510
        %v603 = vpack.c.b16 %v515, %v511
        %v604 = vpack.c.b16 %v516, %v512
        %v605 = vpack.c.b16 %v517, %v513
        %v606 = vpack.c.b16 %v522, %v518
        %v607 = vpack.c.b16 %v523, %v519
        %v608 = vpack.c.b16 %v524, %v520
        %v609 = vpack.c.b16 %v525, %v521
        %v610 = vpack.c.b16 %v530, %v526
        %v611 = vpack.c.b16 %v531, %v527
        %v612 = vpack.c.b16 %v532, %v528
        %v613 = vpack.c.b16 %v533, %v529
        %v614 = vpack.c.b16 %v538, %v534
        %v615 = vpack.c.b16 %v539, %v535
        %v616 = vpack.c.b16 %v540, %v536
        %v617 = vpack.c.b16 %v541, %v537
        %v618 = vpack.c.b16 %v546, %v542
        %v619 = vpack.c.b16 %v547, %v543
        %v620 = vpack.c.b16 %v548, %v544
        %v621 = vpack.c.b16 %v549, %v545
        %v622 = vpack.c.b16 %v554, %v550
        %v623 = vpack.c.b16 %v555, %v551
        %v624 = vpack.c.b16 %v556, %v552
        %v625 = vpack.c.b16 %v557, %v553
        %v626 = vpack.c.b16 %v562, %v558
        %v627 = vpack.c.b16 %v563, %v559
        %v628 = vpack.c.b16 %v564, %v560
        %v629 = vpack.c.b16 %v565, %v561
        %694 = vmatprep.subr.bf16.mxu0 %v567
        %695 = vmatpush1.bf16.msra.mxu0 %v566
        %696 = vmatprep.subr.bf16.mxu0 %v571
        %697 = vmatpush1.bf16.msra.mxu0 %v570
        %698 = vmatprep.subr.bf16.mxu0 %v575
        %699 = vmatpush1.bf16.msra.mxu0 %v574
        %700 = vmatprep.subr.bf16.mxu0 %v579
        %701 = vmatpush1.bf16.msra.mxu0 %v578
        %702 = vmatprep.subr.bf16.mxu0 %v583
        %703 = vmatpush1.bf16.msra.mxu0 %v582
        %704 = vmatprep.subr.bf16.mxu0 %v587
        %705 = vmatpush1.bf16.msra.mxu0 %v586
        %706 = vmatprep.subr.bf16.mxu0 %v591
        %707 = vmatpush1.bf16.msra.mxu0 %v590
        %708 = vmatprep.subr.bf16.mxu0 %v595
        %709 = vmatpush1.bf16.msra.mxu0 %v594
        %710 = vmatprep.subr.bf16.mxu0 %v599
        %711 = vmatpush1.bf16.msra.mxu0 %v598
        %712 = vmatprep.subr.bf16.mxu0 %v603
        %713 = vmatpush1.bf16.msra.mxu0 %v602
        %714 = vmatprep.subr.bf16.mxu0 %v607
        %715 = vmatpush1.bf16.msra.mxu0 %v606
        %716 = vmatprep.subr.bf16.mxu0 %v611
        %717 = vmatpush1.bf16.msra.mxu0 %v610
        %718 = vmatprep.subr.bf16.mxu0 %v615
        %719 = vmatpush1.bf16.msra.mxu0 %v614
        %720 = vmatprep.subr.bf16.mxu0 %v619
        %721 = vmatpush1.bf16.msra.mxu0 %v618
        %722 = vmatprep.subr.bf16.mxu0 %v623
        %723 = vmatpush1.bf16.msra.mxu0 %v622
        %724 = vmatprep.subr.bf16.mxu0 %v627
        %725 = vmatpush1.bf16.msra.mxu0 %v626
        %726 = vmatprep.mubr.bf16.mxu0 %v355
        %727 = vmatmul.mubr.bf16.gmra.mrb[0].mxu0 %v354
        %v728 = vpop.f32.mrb[0].mxu0
        %v729 = vadd.f32 0.0, %v728
        %v730 = vpop.f32.mrb[0].mxu0
        %v731 = vadd.f32 0.0, %v730
        %v732 = vpop.f32.mrb[0].mxu0
        %v733 = vadd.f32 0.0, %v732
        %v734 = vpop.f32.mrb[0].mxu0
        %v735 = vadd.f32 0.0, %v734
        %736 = vmatprep.mubr.bf16.mxu0 %v357
        %737 = vmatmul.mubr.bf16.gmra.mrb[0].mxu0 %v356
        %v738 = vpop.f32.mrb[0].mxu0
        %v739 = vadd.f32 0.0, %v738
        %v740 = vpop.f32.mrb[0].mxu0
        %v741 = vadd.f32 0.0, %v740
        %v742 = vpop.f32.mrb[0].mxu0
        %v743 = vadd.f32 0.0, %v742
        %v744 = vpop.f32.mrb[0].mxu0
        %v745 = vadd.f32 0.0, %v744
        %746 = vmatprep.mubr.bf16.mxu0 %v359
        %747 = vmatmul.mubr.bf16.gmra.mrb[0].mxu0 %v358
        %v748 = vpop.f32.mrb[0].mxu0
        %v749 = vadd.f32 0.0, %v748
        %v750 = vpop.f32.mrb[0].mxu0
        %v751 = vadd.f32 0.0, %v750
        %v752 = vpop.f32.mrb[0].mxu0
        %v753 = vadd.f32 0.0, %v752
        %v754 = vpop.f32.mrb[0].mxu0
        %v755 = vadd.f32 0.0, %v754
        %756 = vmatprep.mubr.bf16.mxu0 %v361
        %757 = vmatmul.mubr.bf16.gmra.mrb[0].mxu0 %v360
        %v758 = vpop.f32.mrb[0].mxu0
        %v759 = vadd.f32 0.0, %v758
        %v760 = vpop.f32.mrb[0].mxu0
        %v761 = vadd.f32 0.0, %v760
        %v762 = vpop.f32.mrb[0].mxu0
        %v763 = vadd.f32 0.0, %v762
        %v764 = vpop.f32.mrb[0].mxu0
        %v765 = vadd.f32 0.0, %v764
        %766 = vmatprep.mubr.bf16.mxu0 %v363
        %767 = vmatmul.mubr.bf16.gmra.mrb[0].mxu0 %v362
        %v768 = vpop.f32.mrb[0].mxu0
        %v769 = vadd.f32 0.0, %v768
        %v770 = vpop.f32.mrb[0].mxu0
        %v771 = vadd.f32 0.0, %v770
        %v772 = vpop.f32.mrb[0].mxu0
        %v773 = vadd.f32 0.0, %v772
        %v774 = vpop.f32.mrb[0].mxu0
        %v775 = vadd.f32 0.0, %v774
        %776 = vdwg.mxu0
        %777 = vmatprep.subr.bf16.mxu0 %v569
        %778 = vmatpush1.bf16.msra.mxu0 %v568
        %779 = vmatprep.subr.bf16.mxu0 %v573
        %780 = vmatpush1.bf16.msra.mxu0 %v572
        %781 = vmatprep.subr.bf16.mxu0 %v577
        %782 = vmatpush1.bf16.msra.mxu0 %v576
        %783 = vmatprep.subr.bf16.mxu0 %v581
        %784 = vmatpush1.bf16.msra.mxu0 %v580
        %785 = vmatprep.subr.bf16.mxu0 %v585
        %786 = vmatpush1.bf16.msra.mxu0 %v584
        %787 = vmatprep.subr.bf16.mxu0 %v589
        %788 = vmatpush1.bf16.msra.mxu0 %v588
        %789 = vmatprep.subr.bf16.mxu0 %v593
        %790 = vmatpush1.bf16.msra.mxu0 %v592
        %791 = vmatprep.subr.bf16.mxu0 %v597
        %792 = vmatpush1.bf16.msra.mxu0 %v596
        %793 = vmatprep.subr.bf16.mxu0 %v601
        %794 = vmatpush1.bf16.msra.mxu0 %v600
        %795 = vmatprep.subr.bf16.mxu0 %v605
        %796 = vmatpush1.bf16.msra.mxu0 %v604
        %797 = vmatprep.subr.bf16.mxu0 %v609
        %798 = vmatpush1.bf16.msra.mxu0 %v608
        %799 = vmatprep.subr.bf16.mxu0 %v613
        %800 = vmatpush1.bf16.msra.mxu0 %v612
        %801 = vmatprep.subr.bf16.mxu0 %v617
        %802 = vmatpush1.bf16.msra.mxu0 %v616
        %803 = vmatprep.subr.bf16.mxu0 %v621
        %804 = vmatpush1.bf16.msra.mxu0 %v620
        %805 = vmatprep.subr.bf16.mxu0 %v625
        %806 = vmatpush1.bf16.msra.mxu0 %v624
        %807 = vmatprep.subr.bf16.mxu0 %v629
        %808 = vmatpush1.bf16.msra.mxu0 %v628
        %809 = vmatprep.mubr.bf16.mxu0 %v355
        %810 = vmatmul.mubr.bf16.gmra.mrb[0].mxu0 %v354
        %v811 = vpop.f32.mrb[0].mxu0
        %v812 = vadd.f32 0.0, %v811
        %v813 = vpop.f32.mrb[0].mxu0
        %v814 = vadd.f32 0.0, %v813
        %v815 = vpop.f32.mrb[0].mxu0
        %v816 = vadd.f32 0.0, %v815
        %v817 = vpop.f32.mrb[0].mxu0
        %v818 = vadd.f32 0.0, %v817
        %819 = vmatprep.mubr.bf16.mxu0 %v357
        %820 = vmatmul.mubr.bf16.gmra.mrb[0].mxu0 %v356
        %v821 = vpop.f32.mrb[0].mxu0
        %v822 = vadd.f32 0.0, %v821
        %v823 = vpop.f32.mrb[0].mxu0
        %v824 = vadd.f32 0.0, %v823
        %v825 = vpop.f32.mrb[0].mxu0
        %v826 = vadd.f32 0.0, %v825
        %v827 = vpop.f32.mrb[0].mxu0
        %v828 = vadd.f32 0.0, %v827
        %829 = vmatprep.mubr.bf16.mxu0 %v359
        %830 = vmatmul.mubr.bf16.gmra.mrb[0].mxu0 %v358
        %v831 = vpop.f32.mrb[0].mxu0
        %v832 = vadd.f32 0.0, %v831
        %v833 = vpop.f32.mrb[0].mxu0
        %v834 = vadd.f32 0.0, %v833
        %v835 = vpop.f32.mrb[0].mxu0
        %v836 = vadd.f32 0.0, %v835
        %v837 = vpop.f32.mrb[0].mxu0
        %v838 = vadd.f32 0.0, %v837
        %839 = vmatprep.mubr.bf16.mxu0 %v361
        %840 = vmatmul.mubr.bf16.gmra.mrb[0].mxu0 %v360
        %v841 = vpop.f32.mrb[0].mxu0
        %v842 = vadd.f32 0.0, %v841
        %v843 = vpop.f32.mrb[0].mxu0
        %v844 = vadd.f32 0.0, %v843
        %v845 = vpop.f32.mrb[0].mxu0
        %v846 = vadd.f32 0.0, %v845
        %v847 = vpop.f32.mrb[0].mxu0
        %v848 = vadd.f32 0.0, %v847
        %849 = vmatprep.mubr.bf16.mxu0 %v363
        %850 = vmatmul.mubr.bf16.gmra.mrb[0].mxu0 %v362
        %v851 = vpop.f32.mrb[0].mxu0
        %v852 = vadd.f32 0.0, %v851
        %v853 = vpop.f32.mrb[0].mxu0
        %v854 = vadd.f32 0.0, %v853
        %v855 = vpop.f32.mrb[0].mxu0
        %v856 = vadd.f32 0.0, %v855
        %v857 = vpop.f32.mrb[0].mxu0
        %v858 = vadd.f32 0.0, %v857
        %859 = vdwg.mxu0
        %v860 = vmul.f32 %v729, %v729
        %v861 = vmul.f32 %v731, %v731
        %v862 = vmul.f32 %v733, %v733
        %v863 = vmul.f32 %v735, %v735
        %v864 = vmul.f32 %v739, %v739
        %v865 = vmul.f32 %v741, %v741
        %v866 = vmul.f32 %v743, %v743
        %v867 = vmul.f32 %v745, %v745
        %v868 = vmul.f32 %v749, %v749
        %v869 = vmul.f32 %v751, %v751
        %v870 = vmul.f32 %v753, %v753
        %v871 = vmul.f32 %v755, %v755
        %v872 = vmul.f32 %v759, %v759
        %v873 = vmul.f32 %v761, %v761
        %v874 = vmul.f32 %v763, %v763
        %v875 = vmul.f32 %v765, %v765
        %v876 = vmul.f32 %v769, %v769
        %v877 = vmul.f32 %v771, %v771
        %v878 = vmul.f32 %v773, %v773
        %v879 = vmul.f32 %v775, %v775
        %v880 = vmul.f32 %v812, %v812
        %v881 = vmul.f32 %v814, %v814
        %v882 = vmul.f32 %v816, %v816
        %v883 = vmul.f32 %v818, %v818
        %v884 = vmul.f32 %v822, %v822
        %v885 = vmul.f32 %v824, %v824
        %v886 = vmul.f32 %v826, %v826
        %v887 = vmul.f32 %v828, %v828
        %v888 = vmul.f32 %v832, %v832
        %v889 = vmul.f32 %v834, %v834
        %v890 = vmul.f32 %v836, %v836
        %v891 = vmul.f32 %v838, %v838
        %v892 = vmul.f32 %v842, %v842
        %v893 = vmul.f32 %v844, %v844
        %v894 = vmul.f32 %v846, %v846
        %v895 = vmul.f32 %v848, %v848
        %v896 = vmul.f32 %v852, %v852
        %v897 = vmul.f32 %v854, %v854
        %v898 = vmul.f32 %v856, %v856
        %v899 = vmul.f32 %v858, %v858
        %v900 = vadd.f32 %v860, %v880
        %v901 = vadd.f32 %v861, %v881
        %v902 = vadd.f32 %v862, %v882
        %v903 = vadd.f32 %v863, %v883
        %v904 = vadd.f32 %v864, %v884
        %v905 = vadd.f32 %v865, %v885
        %v906 = vadd.f32 %v866, %v886
        %v907 = vadd.f32 %v867, %v887
        %v908 = vadd.f32 %v868, %v888
        %v909 = vadd.f32 %v869, %v889
        %v910 = vadd.f32 %v870, %v890
        %v911 = vadd.f32 %v871, %v891
        %v912 = vadd.f32 %v872, %v892
        %v913 = vadd.f32 %v873, %v893
        %v914 = vadd.f32 %v874, %v894
        %v915 = vadd.f32 %v875, %v895
        %v916 = vadd.f32 %v876, %v896
        %v917 = vadd.f32 %v877, %v897
        %v918 = vadd.f32 %v878, %v898
        %v919 = vadd.f32 %v879, %v899
        %v920 = vld [vmem:[%s2] sm:$0xff]
        %v921 = vld [vmem:[%s2 + $0x8] sm:$0xff]
        %v922 = vld [vmem:[%s2 + $0x10] sm:$0xff]
        %v923 = vld [vmem:[%s2 + $0x18] sm:$0xff]
        %v924 = vld [vmem:[%s2 + $0x20] sm:$0xff]
        %v925 = vld [vmem:[%s2 + $0x28] sm:$0xff]
        %v926 = vld [vmem:[%s2 + $0x30] sm:$0xff]
        %v927 = vld [vmem:[%s2 + $0x38] sm:$0xff]
        %v928 = vld [vmem:[%s2 + $0x40] sm:$0xff]
        %v929 = vld [vmem:[%s2 + $0x48] sm:$0xff]
        %v930 = vld [vmem:[%s2 + $0x50] sm:$0xff]
        %v931 = vld [vmem:[%s2 + $0x58] sm:$0xff]
        %v932 = vld [vmem:[%s2 + $0x60] sm:$0xff]
        %v933 = vld [vmem:[%s2 + $0x68] sm:$0xff]
        %v934 = vld [vmem:[%s2 + $0x70] sm:$0xff]
        %v935 = vld [vmem:[%s2 + $0x78] sm:$0xff]
        %v936 = vld [vmem:[%s2 + $0x80] sm:$0xff]
        %v937 = vld [vmem:[%s2 + $0x88] sm:$0xff]
        %v938 = vld [vmem:[%s2 + $0x90] sm:$0xff]
        %v939 = vld [vmem:[%s2 + $0x98] sm:$0xff]
        %v940 = vld [vmem:[%s2 + $0xa0] sm:$0xff]
        %v941 = vld [vmem:[%s2 + $0xa8] sm:$0xff]
        %v942 = vld [vmem:[%s2 + $0xb0] sm:$0xff]
        %v943 = vld [vmem:[%s2 + $0xb8] sm:$0xff]
        %v944 = vld [vmem:[%s2 + $0xc0] sm:$0xff]
        %v945 = vld [vmem:[%s2 + $0xc8] sm:$0xff]
        %v946 = vld [vmem:[%s2 + $0xd0] sm:$0xff]
        %v947 = vld [vmem:[%s2 + $0xd8] sm:$0xff]
        %v948 = vld [vmem:[%s2 + $0xe0] sm:$0xff]
        %v949 = vld [vmem:[%s2 + $0xe8] sm:$0xff]
        %v950 = vld [vmem:[%s2 + $0xf0] sm:$0xff]
        %v951 = vld [vmem:[%s2 + $0xf8] sm:$0xff]
        %952 = vmatprep.subr.mxu0 0.0
        %953 = vmatpush1.msra.mxu0 %v920
        %954 = vmatprep.subr.mxu0 0.0
        %955 = vmatpush1.msra.mxu0 %v921
        %956 = vmatprep.subr.mxu0 0.0
        %957 = vmatpush1.msra.mxu0 %v922
        %958 = vmatprep.subr.mxu0 0.0
        %959 = vmatpush1.msra.mxu0 %v923
        %960 = vmatprep.subr.mxu0 0.0
        %961 = vmatpush1.msra.mxu0 %v924
        %962 = vmatprep.subr.mxu0 0.0
        %963 = vmatpush1.msra.mxu0 %v925
        %964 = vmatprep.subr.mxu0 0.0
        %965 = vmatpush1.msra.mxu0 %v926
        %966 = vmatprep.subr.mxu0 0.0
        %967 = vmatpush1.msra.mxu0 %v927
        %968 = vmatprep.subr.mxu0 0.0
        %969 = vmatpush1.msra.mxu0 %v928
        %970 = vmatprep.subr.mxu0 0.0
        %971 = vmatpush1.msra.mxu0 %v929
        %972 = vmatprep.subr.mxu0 0.0
        %973 = vmatpush1.msra.mxu0 %v930
        %974 = vmatprep.subr.mxu0 0.0
        %975 = vmatpush1.msra.mxu0 %v931
        %976 = vmatprep.subr.mxu0 0.0
        %977 = vmatpush1.msra.mxu0 %v932
        %978 = vmatprep.subr.mxu0 0.0
        %979 = vmatpush1.msra.mxu0 %v933
        %980 = vmatprep.subr.mxu0 0.0
        %981 = vmatpush1.msra.mxu0 %v934
        %982 = vmatprep.subr.mxu0 0.0
        %983 = vmatpush1.msra.mxu0 %v935
        %984 = vmatprep.subr.mxu0 0.0
        %985 = vmatpush1.msra.mxu0 %v936
        %986 = vmatprep.subr.mxu0 0.0
        %987 = vmatpush1.msra.mxu0 %v937
        %988 = vmatprep.subr.mxu0 0.0
        %989 = vmatpush1.msra.mxu0 %v938
        %990 = vmatprep.subr.mxu0 0.0
        %991 = vmatpush1.msra.mxu0 %v939
        %992 = vmatprep.subr.mxu0 0.0
        %993 = vmatpush1.msra.mxu0 %v940
        %994 = vmatprep.subr.mxu0 0.0
        %995 = vmatpush1.msra.mxu0 %v941
        %996 = vmatprep.subr.mxu0 0.0
        %997 = vmatpush1.msra.mxu0 %v942
        %998 = vmatprep.subr.mxu0 0.0
        %999 = vmatpush1.msra.mxu0 %v943
        %1000 = vmatprep.subr.mxu0 0.0
        %1001 = vmatpush1.msra.mxu0 %v944
        %1002 = vmatprep.subr.mxu0 0.0
        %1003 = vmatpush1.msra.mxu0 %v945
        %1004 = vmatprep.subr.mxu0 0.0
        %1005 = vmatpush1.msra.mxu0 %v946
        %1006 = vmatprep.subr.mxu0 0.0
        %1007 = vmatpush1.msra.mxu0 %v947
        %1008 = vmatprep.subr.mxu0 0.0
        %1009 = vmatpush1.msra.mxu0 %v948
        %1010 = vmatprep.subr.mxu0 0.0
        %1011 = vmatpush1.msra.mxu0 %v949
        %1012 = vmatprep.subr.mxu0 0.0
        %1013 = vmatpush1.msra.mxu0 %v950
        %1014 = vmatprep.subr.mxu0 0.0
        %1015 = vmatpush1.msra.mxu0 %v951
        %1016 = vmatprep.mubr.f32.mxu0 %v901
        %1017 = vmatmul.mubr.f32.gmra.mrb[0].mxu0 %v900
        %v1018 = vpop.f32.mrb[0].mxu0
        %v1019 = vadd.f32 0.0, %v1018
        %v1020 = vpop.f32.mrb[0].mxu0
        %1021 = vmatprep.mubr.f32.mxu0 %v903
        %1022 = vmatmul.mubr.f32.gmra.mrb[0].mxu0 %v902
        %v1023 = vpop.f32.mrb[0].mxu0
        %v1024 = vadd.f32 0.0, %v1023
        %v1025 = vpop.f32.mrb[0].mxu0
        %1026 = vmatprep.mubr.f32.mxu0 %v905
        %1027 = vmatmul.mubr.f32.gmra.mrb[0].mxu0 %v904
        %v1028 = vpop.f32.mrb[0].mxu0
        %v1029 = vadd.f32 0.0, %v1028
        %v1030 = vpop.f32.mrb[0].mxu0
        %1031 = vmatprep.mubr.f32.mxu0 %v907
        %1032 = vmatmul.mubr.f32.gmra.mrb[0].mxu0 %v906
        %v1033 = vpop.f32.mrb[0].mxu0
        %v1034 = vadd.f32 0.0, %v1033
        %v1035 = vpop.f32.mrb[0].mxu0
        %1036 = vmatprep.mubr.f32.mxu0 %v909
        %1037 = vmatmul.mubr.f32.gmra.mrb[0].mxu0 %v908
        %v1038 = vpop.f32.mrb[0].mxu0
        %v1039 = vadd.f32 0.0, %v1038
        %v1040 = vpop.f32.mrb[0].mxu0
        %1041 = vmatprep.mubr.f32.mxu0 %v911
        %1042 = vmatmul.mubr.f32.gmra.mrb[0].mxu0 %v910
        %v1043 = vpop.f32.mrb[0].mxu0
        %v1044 = vadd.f32 0.0, %v1043
        %v1045 = vpop.f32.mrb[0].mxu0
        %1046 = vmatprep.mubr.f32.mxu0 %v913
        %1047 = vmatmul.mubr.f32.gmra.mrb[0].mxu0 %v912
        %v1048 = vpop.f32.mrb[0].mxu0
        %v1049 = vadd.f32 0.0, %v1048
        %v1050 = vpop.f32.mrb[0].mxu0
        %1051 = vmatprep.mubr.f32.mxu0 %v915
        %1052 = vmatmul.mubr.f32.gmra.mrb[0].mxu0 %v914
        %v1053 = vpop.f32.mrb[0].mxu0
        %v1054 = vadd.f32 0.0, %v1053
        %v1055 = vpop.f32.mrb[0].mxu0
        %1056 = vmatprep.mubr.f32.mxu0 %v917
        %1057 = vmatmul.mubr.f32.gmra.mrb[0].mxu0 %v916
        %v1058 = vpop.f32.mrb[0].mxu0
        %v1059 = vadd.f32 0.0, %v1058
        %v1060 = vpop.f32.mrb[0].mxu0
        %1061 = vmatprep.mubr.f32.mxu0 %v919
        %1062 = vmatmul.mubr.f32.gmra.mrb[0].mxu0 %v918
        %v1063 = vpop.f32.mrb[0].mxu0
        %v1064 = vadd.f32 0.0, %v1063
        %v1065 = vpop.f32.mrb[0].mxu0
        %1066 = vdwg.mxu0
        %v1067 = vrsqrt.pop %v1019
        %v1068 = vmul.f32 %v1019, %v1067
        %vm1069 = vcmp.eq.f32.partialorder %v1019, inf
        %v1070 = vsel %vm1069, %v1019, %v1068
        %vm1071 = vcmp.eq.f32.partialorder %v1019, 0.0
        %v1072 = vand.u32 %v1019, 2147483648
        %v1073 = vsel %vm1071, %v1072, %v1070
        %v1074 = vrsqrt.pop %v1024
        %v1075 = vmul.f32 %v1024, %v1074
        %vm1076 = vcmp.eq.f32.partialorder %v1024, inf
        %v1077 = vsel %vm1076, %v1024, %v1075
        %vm1078 = vcmp.eq.f32.partialorder %v1024, 0.0
        %v1079 = vand.u32 %v1024, 2147483648
        %v1080 = vsel %vm1078, %v1079, %v1077
        %v1081 = vrsqrt.pop %v1029
        %v1082 = vmul.f32 %v1029, %v1081
        %vm1083 = vcmp.eq.f32.partialorder %v1029, inf
        %v1084 = vsel %vm1083, %v1029, %v1082
        %vm1085 = vcmp.eq.f32.partialorder %v1029, 0.0
        %v1086 = vand.u32 %v1029, 2147483648
        %v1087 = vsel %vm1085, %v1086, %v1084
        %v1088 = vrsqrt.pop %v1034
        %v1089 = vmul.f32 %v1034, %v1088
        %vm1090 = vcmp.eq.f32.partialorder %v1034, inf
        %v1091 = vsel %vm1090, %v1034, %v1089
        %vm1092 = vcmp.eq.f32.partialorder %v1034, 0.0
        %v1093 = vand.u32 %v1034, 2147483648
        %v1094 = vsel %vm1092, %v1093, %v1091
        %v1095 = vrsqrt.pop %v1039
        %v1096 = vmul.f32 %v1039, %v1095
        %vm1097 = vcmp.eq.f32.partialorder %v1039, inf
        %v1098 = vsel %vm1097, %v1039, %v1096
        %vm1099 = vcmp.eq.f32.partialorder %v1039, 0.0
        %v1100 = vand.u32 %v1039, 2147483648
        %v1101 = vsel %vm1099, %v1100, %v1098
        %v1102 = vrsqrt.pop %v1044
        %v1103 = vmul.f32 %v1044, %v1102
        %vm1104 = vcmp.eq.f32.partialorder %v1044, inf
        %v1105 = vsel %vm1104, %v1044, %v1103
        %vm1106 = vcmp.eq.f32.partialorder %v1044, 0.0
        %v1107 = vand.u32 %v1044, 2147483648
        %v1108 = vsel %vm1106, %v1107, %v1105
        %v1109 = vrsqrt.pop %v1049
        %v1110 = vmul.f32 %v1049, %v1109
        %vm1111 = vcmp.eq.f32.partialorder %v1049, inf
        %v1112 = vsel %vm1111, %v1049, %v1110
        %vm1113 = vcmp.eq.f32.partialorder %v1049, 0.0
        %v1114 = vand.u32 %v1049, 2147483648
        %v1115 = vsel %vm1113, %v1114, %v1112
        %v1116 = vrsqrt.pop %v1054
        %v1117 = vmul.f32 %v1054, %v1116
        %vm1118 = vcmp.eq.f32.partialorder %v1054, inf
        %v1119 = vsel %vm1118, %v1054, %v1117
        %vm1120 = vcmp.eq.f32.partialorder %v1054, 0.0
        %v1121 = vand.u32 %v1054, 2147483648
        %v1122 = vsel %vm1120, %v1121, %v1119
        %v1123 = vrsqrt.pop %v1059
        %v1124 = vmul.f32 %v1059, %v1123
        %vm1125 = vcmp.eq.f32.partialorder %v1059, inf
        %v1126 = vsel %vm1125, %v1059, %v1124
        %vm1127 = vcmp.eq.f32.partialorder %v1059, 0.0
        %v1128 = vand.u32 %v1059, 2147483648
        %v1129 = vsel %vm1127, %v1128, %v1126
        %v1130 = vrsqrt.pop %v1064
        %v1131 = vmul.f32 %v1064, %v1130
        %vm1132 = vcmp.eq.f32.partialorder %v1064, inf
        %v1133 = vsel %vm1132, %v1064, %v1131
        %vm1134 = vcmp.eq.f32.partialorder %v1064, 0.0
        %v1135 = vand.u32 %v1064, 2147483648
        %v1136 = vsel %vm1134, %v1135, %v1133
        %1137 = vst.msk [vmem:[#allocation2] sm:$0xff] %vm237, %v1073
        %1138 = vst.msk [vmem:[#allocation2 + $0x8] sm:$0xff] %vm237, %v1080
        %1139 = vst.msk [vmem:[#allocation2 + $0x10] sm:$0xff] %vm237, %v1087
        %1140 = vst.msk [vmem:[#allocation2 + $0x18] sm:$0xff] %vm237, %v1094
        %1141 = vst.msk [vmem:[#allocation2 + $0x20] sm:$0xff] %vm237, %v1101
        %1142 = vst.msk [vmem:[#allocation3] sm:$0xff] %vm237, %v1108
        %1143 = vst.msk [vmem:[#allocation3 + $0x8] sm:$0xff] %vm237, %v1115
        %1144 = vst.msk [vmem:[#allocation3 + $0x10] sm:$0xff] %vm237, %v1122
        %1145 = vst.msk [vmem:[#allocation3 + $0x18] sm:$0xff] %vm237, %v1129
        %1146 = vst.msk [vmem:[#allocation3 + $0x20] sm:$0xff] %vm237, %v1136
        %v1147 = vld [vmem:[#allocation2] sm:$0xff]
        %v1148 = vld [vmem:[#allocation2 + $0x8] sm:$0xff]
        %v1149 = vld [vmem:[#allocation2 + $0x10] sm:$0xff]
        %v1150 = vld [vmem:[#allocation2 + $0x18] sm:$0xff]
        %v1151 = vld [vmem:[#allocation2 + $0x20] sm:$0xff]
        %v1152 = vld [vmem:[#allocation3] sm:$0xff]
        %v1153 = vld [vmem:[#allocation3 + $0x8] sm:$0xff]
        %v1154 = vld [vmem:[#allocation3 + $0x10] sm:$0xff]
        %v1155 = vld [vmem:[#allocation3 + $0x18] sm:$0xff]
        %v1156 = vld [vmem:[#allocation3 + $0x20] sm:$0xff]
        %v1157 = vld [vmem:[%s3] sm:$0xff]
        %v1158 = vld [vmem:[%s3 + $0x8] sm:$0xff]
        %vm1159 = vcmask 326656
        %v1161 = vsel %vm1159, %v1157, 0
        %v1164 = vsel %vm1159, %v1158, 0
        %1166 = vmatprep.subr.mxu0 0.0
        %1167 = vmatpush1.msra.mxu0 %v1147
        %1168 = vmatprep.subr.mxu0 0.0
        %1169 = vmatpush1.msra.mxu0 %v1148
        %1170 = vmatprep.subr.mxu0 0.0
        %1171 = vmatpush1.msra.mxu0 %v1149
        %1172 = vmatprep.subr.mxu0 0.0
        %1173 = vmatpush1.msra.mxu0 %v1150
        %1174 = vmatprep.subr.mxu0 0.0
        %1175 = vmatpush1.msra.mxu0 %v1151
        %1176 = vmatprep.subr.mxu0 0.0
        %1177 = vmatpush1.msra.mxu0 0.0
        %1178 = vmatprep.subr.mxu0 0.0
        %1179 = vmatpush1.msra.mxu0 0.0
        %1180 = vmatprep.subr.mxu0 0.0
        %1181 = vmatpush1.msra.mxu0 0.0
        %1182 = vmatprep.subr.mxu0 0.0
        %1183 = vmatpush1.msra.mxu0 0.0
        %1184 = vmatprep.subr.mxu0 0.0
        %1185 = vmatpush1.msra.mxu0 0.0
        %1186 = vmatprep.subr.mxu0 0.0
        %1187 = vmatpush1.msra.mxu0 0.0
        %1188 = vmatprep.subr.mxu0 0.0
        %1189 = vmatpush1.msra.mxu0 0.0
        %1190 = vmatprep.subr.mxu0 0.0
        %1191 = vmatpush1.msra.mxu0 0.0
        %1192 = vmatprep.subr.mxu0 0.0
        %1193 = vmatpush1.msra.mxu0 0.0
        %1194 = vmatprep.subr.mxu0 0.0
        %1195 = vmatpush1.msra.mxu0 0.0
        %1196 = vmatprep.subr.mxu0 0.0
        %1197 = vmatpush1.msra.mxu0 0.0
        %1198 = vmatprep.subr.mxu0 0.0
        %1199 = vmatpush1.msra.mxu0 0.0
        %1200 = vmatprep.subr.mxu0 0.0
        %1201 = vmatpush1.msra.mxu0 0.0
        %1202 = vmatprep.subr.mxu0 0.0
        %1203 = vmatpush1.msra.mxu0 0.0
        %1204 = vmatprep.subr.mxu0 0.0
        %1205 = vmatpush1.msra.mxu0 0.0
        %1206 = vmatprep.subr.mxu0 0.0
        %1207 = vmatpush1.msra.mxu0 0.0
        %1208 = vmatprep.subr.mxu0 0.0
        %1209 = vmatpush1.msra.mxu0 0.0
        %1210 = vmatprep.subr.mxu0 0.0
        %1211 = vmatpush1.msra.mxu0 0.0
        %1212 = vmatprep.subr.mxu0 0.0
        %1213 = vmatpush1.msra.mxu0 0.0
        %1214 = vmatprep.subr.mxu0 0.0
        %1215 = vmatpush1.msra.mxu0 0.0
        %1216 = vmatprep.subr.mxu0 0.0
        %1217 = vmatpush1.msra.mxu0 0.0
        %1218 = vmatprep.subr.mxu0 0.0
        %1219 = vmatpush1.msra.mxu0 0.0
        %1220 = vmatprep.subr.mxu0 0.0
        %1221 = vmatpush1.msra.mxu0 0.0
        %1222 = vmatprep.subr.mxu0 0.0
        %1223 = vmatpush1.msra.mxu0 0.0
        %1224 = vmatprep.subr.mxu0 0.0
        %1225 = vmatpush1.msra.mxu0 0.0
        %1226 = vmatprep.subr.mxu0 0.0
        %1227 = vmatpush1.msra.mxu0 0.0
        %1228 = vmatprep.subr.mxu0 0.0
        %1229 = vmatpush1.msra.mxu0 0.0
        %1230 = vmatprep.mubr.f32.mxu0 0.0
        %1231 = vmatmul.mubr.f32.gmra.mrb[0].mxu0 %v1161
        %v1232 = vpop.f32.mrb[0].mxu0
        %v1233 = vadd.f32 0.0, %v1232
        %v1234 = vpop.f32.mrb[0].mxu0
        %1235 = vmatprep.mubr.f32.mxu0 0.0
        %1236 = vmatmul.mubr.f32.gmra.mrb[0].mxu0 %v1164
        %v1237 = vpop.f32.mrb[0].mxu0
        %v1238 = vadd.f32 0.0, %v1237
        %v1239 = vpop.f32.mrb[0].mxu0
        %1240 = vdwg.mxu0
        %v1241 = vmul.f32 %v1147, %v1147
        %v1242 = vmul.f32 %v1148, %v1148
        %v1243 = vmul.f32 %v1149, %v1149
        %v1244 = vmul.f32 %v1150, %v1150
        %v1245 = vmul.f32 %v1151, %v1151
        %1246 = vmatprep.subr.mxu0 0.0
        %1247 = vmatpush1.msra.mxu0 %v1241
        %1248 = vmatprep.subr.mxu0 0.0
        %1249 = vmatpush1.msra.mxu0 %v1242
        %1250 = vmatprep.subr.mxu0 0.0
        %1251 = vmatpush1.msra.mxu0 %v1243
        %1252 = vmatprep.subr.mxu0 0.0
        %1253 = vmatpush1.msra.mxu0 %v1244
        %1254 = vmatprep.subr.mxu0 0.0
        %1255 = vmatpush1.msra.mxu0 %v1245
        %1256 = vmatprep.subr.mxu0 0.0
        %1257 = vmatpush1.msra.mxu0 0.0
        %1258 = vmatprep.subr.mxu0 0.0
        %1259 = vmatpush1.msra.mxu0 0.0
        %1260 = vmatprep.subr.mxu0 0.0
        %1261 = vmatpush1.msra.mxu0 0.0
        %1262 = vmatprep.subr.mxu0 0.0
        %1263 = vmatpush1.msra.mxu0 0.0
        %1264 = vmatprep.subr.mxu0 0.0
        %1265 = vmatpush1.msra.mxu0 0.0
        %1266 = vmatprep.subr.mxu0 0.0
        %1267 = vmatpush1.msra.mxu0 0.0
        %1268 = vmatprep.subr.mxu0 0.0
        %1269 = vmatpush1.msra.mxu0 0.0
        %1270 = vmatprep.subr.mxu0 0.0
        %1271 = vmatpush1.msra.mxu0 0.0
        %1272 = vmatprep.subr.mxu0 0.0
        %1273 = vmatpush1.msra.mxu0 0.0
        %1274 = vmatprep.subr.mxu0 0.0
        %1275 = vmatpush1.msra.mxu0 0.0
        %1276 = vmatprep.subr.mxu0 0.0
        %1277 = vmatpush1.msra.mxu0 0.0
        %1278 = vmatprep.subr.mxu0 0.0
        %1279 = vmatpush1.msra.mxu0 0.0
        %1280 = vmatprep.subr.mxu0 0.0
        %1281 = vmatpush1.msra.mxu0 0.0
        %1282 = vmatprep.subr.mxu0 0.0
        %1283 = vmatpush1.msra.mxu0 0.0
        %1284 = vmatprep.subr.mxu0 0.0
        %1285 = vmatpush1.msra.mxu0 0.0
        %1286 = vmatprep.subr.mxu0 0.0
        %1287 = vmatpush1.msra.mxu0 0.0
        %1288 = vmatprep.subr.mxu0 0.0
        %1289 = vmatpush1.msra.mxu0 0.0
        %1290 = vmatprep.subr.mxu0 0.0
        %1291 = vmatpush1.msra.mxu0 0.0
        %1292 = vmatprep.subr.mxu0 0.0
        %1293 = vmatpush1.msra.mxu0 0.0
        %1294 = vmatprep.subr.mxu0 0.0
        %1295 = vmatpush1.msra.mxu0 0.0
        %1296 = vmatprep.subr.mxu0 0.0
        %1297 = vmatpush1.msra.mxu0 0.0
        %1298 = vmatprep.subr.mxu0 0.0
        %1299 = vmatpush1.msra.mxu0 0.0
        %1300 = vmatprep.subr.mxu0 0.0
        %1301 = vmatpush1.msra.mxu0 0.0
        %1302 = vmatprep.subr.mxu0 0.0
        %1303 = vmatpush1.msra.mxu0 0.0
        %1304 = vmatprep.subr.mxu0 0.0
        %1305 = vmatpush1.msra.mxu0 0.0
        %1306 = vmatprep.subr.mxu0 0.0
        %1307 = vmatpush1.msra.mxu0 0.0
        %1308 = vmatprep.subr.mxu0 0.0
        %1309 = vmatpush1.msra.mxu0 0.0
        %1310 = vmatprep.mubr.f32.mxu0 0.0
        %1311 = vmatmul.mubr.f32.gmra.mrb[0].mxu0 %v1161
        %v1312 = vpop.f32.mrb[0].mxu0
        %v1313 = vadd.f32 0.0, %v1312
        %v1314 = vpop.f32.mrb[0].mxu0
        %1315 = vmatprep.mubr.f32.mxu0 0.0
        %1316 = vmatmul.mubr.f32.gmra.mrb[0].mxu0 %v1164
        %v1317 = vpop.f32.mrb[0].mxu0
        %v1318 = vadd.f32 0.0, %v1317
        %v1319 = vpop.f32.mrb[0].mxu0
        %1320 = vdwg.mxu0
        %v1321 = vmul.f32 %v1152, %v1152
        %v1322 = vmul.f32 %v1153, %v1153
        %v1323 = vmul.f32 %v1154, %v1154
        %v1324 = vmul.f32 %v1155, %v1155
        %v1325 = vmul.f32 %v1156, %v1156
        %v1326 = vrsqrt.pop %v1313
        %v1327 = vmul.f32 %v1313, %v1326
        %vm1328 = vcmp.eq.f32.partialorder %v1313, inf
        %v1329 = vsel %vm1328, %v1313, %v1327
        %vm1330 = vcmp.eq.f32.partialorder %v1313, 0.0
        %v1331 = vand.u32 %v1313, 2147483648
        %v1332 = vsel %vm1330, %v1331, %v1329
        %v1333 = vrsqrt.pop %v1318
        %v1334 = vmul.f32 %v1318, %v1333
        %vm1335 = vcmp.eq.f32.partialorder %v1318, inf
        %v1336 = vsel %vm1335, %v1318, %v1334
        %vm1337 = vcmp.eq.f32.partialorder %v1318, 0.0
        %v1338 = vand.u32 %v1318, 2147483648
        %v1339 = vsel %vm1337, %v1338, %v1336
        %1340 = vmatprep.subr.mxu0 0.0
        %1341 = vmatpush1.msra.mxu0 %v1321
        %1342 = vmatprep.subr.mxu0 0.0
        %1343 = vmatpush1.msra.mxu0 %v1322
        %1344 = vmatprep.subr.mxu0 0.0
        %1345 = vmatpush1.msra.mxu0 %v1323
        %1346 = vmatprep.subr.mxu0 0.0
        %1347 = vmatpush1.msra.mxu0 %v1324
        %1348 = vmatprep.subr.mxu0 0.0
        %1349 = vmatpush1.msra.mxu0 %v1325
        %1350 = vmatprep.subr.mxu0 0.0
        %1351 = vmatpush1.msra.mxu0 0.0
        %1352 = vmatprep.subr.mxu0 0.0
        %1353 = vmatpush1.msra.mxu0 0.0
        %1354 = vmatprep.subr.mxu0 0.0
        %1355 = vmatpush1.msra.mxu0 0.0
        %1356 = vmatprep.subr.mxu0 0.0
        %1357 = vmatpush1.msra.mxu0 0.0
        %1358 = vmatprep.subr.mxu0 0.0
        %1359 = vmatpush1.msra.mxu0 0.0
        %1360 = vmatprep.subr.mxu0 0.0
        %1361 = vmatpush1.msra.mxu0 0.0
        %1362 = vmatprep.subr.mxu0 0.0
        %1363 = vmatpush1.msra.mxu0 0.0
        %1364 = vmatprep.subr.mxu0 0.0
        %1365 = vmatpush1.msra.mxu0 0.0
        %1366 = vmatprep.subr.mxu0 0.0
        %1367 = vmatpush1.msra.mxu0 0.0
        %1368 = vmatprep.subr.mxu0 0.0
        %1369 = vmatpush1.msra.mxu0 0.0
        %1370 = vmatprep.subr.mxu0 0.0
        %1371 = vmatpush1.msra.mxu0 0.0
        %1372 = vmatprep.subr.mxu0 0.0
        %1373 = vmatpush1.msra.mxu0 0.0
        %1374 = vmatprep.subr.mxu0 0.0
        %1375 = vmatpush1.msra.mxu0 0.0
        %1376 = vmatprep.subr.mxu0 0.0
        %1377 = vmatpush1.msra.mxu0 0.0
        %1378 = vmatprep.subr.mxu0 0.0
        %1379 = vmatpush1.msra.mxu0 0.0
        %1380 = vmatprep.subr.mxu0 0.0
        %1381 = vmatpush1.msra.mxu0 0.0
        %1382 = vmatprep.subr.mxu0 0.0
        %1383 = vmatpush1.msra.mxu0 0.0
        %1384 = vmatprep.subr.mxu0 0.0
        %1385 = vmatpush1.msra.mxu0 0.0
        %1386 = vmatprep.subr.mxu0 0.0
        %1387 = vmatpush1.msra.mxu0 0.0
        %1388 = vmatprep.subr.mxu0 0.0
        %1389 = vmatpush1.msra.mxu0 0.0
        %1390 = vmatprep.subr.mxu0 0.0
        %1391 = vmatpush1.msra.mxu0 0.0
        %1392 = vmatprep.subr.mxu0 0.0
        %1393 = vmatpush1.msra.mxu0 0.0
        %1394 = vmatprep.subr.mxu0 0.0
        %1395 = vmatpush1.msra.mxu0 0.0
        %1396 = vmatprep.subr.mxu0 0.0
        %1397 = vmatpush1.msra.mxu0 0.0
        %1398 = vmatprep.subr.mxu0 0.0
        %1399 = vmatpush1.msra.mxu0 0.0
        %1400 = vmatprep.subr.mxu0 0.0
        %1401 = vmatpush1.msra.mxu0 0.0
        %1402 = vmatprep.subr.mxu0 0.0
        %1403 = vmatpush1.msra.mxu0 0.0
        %1404 = vmatprep.mubr.f32.mxu0 0.0
        %1405 = vmatmul.mubr.f32.gmra.mrb[0].mxu0 %v1161
        %v1406 = vpop.f32.mrb[0].mxu0
        %v1407 = vadd.f32 1e-08, %v1406
        %v1408 = vpop.f32.mrb[0].mxu0
        %1409 = vmatprep.mubr.f32.mxu0 0.0
        %1410 = vmatmul.mubr.f32.gmra.mrb[0].mxu0 %v1164
        %v1411 = vpop.f32.mrb[0].mxu0
        %v1412 = vadd.f32 1e-08, %v1411
        %v1413 = vpop.f32.mrb[0].mxu0
        %1414 = vdwg.mxu0
        %v1415 = vrsqrt.pop %v1407
        %v1416 = vrsqrt.pop %v1412
        %v1417 = vmul.f32 %v1332, %v1415
        %v1418 = vmul.f32 %v1339, %v1416
        %v1419 = vld [vmem:[#allocation2] sm:$0xff]
        %v1420 = vld [vmem:[#allocation2 + $0x8] sm:$0xff]
        %v1421 = vld [vmem:[#allocation3] sm:$0xff]
        %v1422 = vld [vmem:[#allocation3 + $0x8] sm:$0xff]
        %v1423 = vmul.f32 %v1421, %v1417
        %v1424 = vmul.f32 %v1422, %v1418
        %v1425 = vmul.f32 %v1419, 6.623413
        %v1426 = vmul.f32 %v1420, 6.623413
        %v1427 = vmin.f32 %v1423, %v1425
        %v1428 = vmin.f32 %v1424, %v1426
        %v1429 = vadd.f32 %v1427, 0.0
        %v1430 = vadd.f32 %v1428, 0.0
        %v1431 = vmul.f32 %v1427, %v1427
        %v1432 = vmul.f32 %v1428, %v1428
        %v1433 = vadd.f32 %v1431, 0.0
        %v1434 = vadd.f32 %v1432, 0.0
        %v1435 = vmul.f32 %v1419, %v1427
        %v1436 = vmul.f32 %v1420, %v1428
        %v1437 = vadd.f32 %v1435, 0.0
        %v1438 = vadd.f32 %v1436, 0.0
        %v1439 = vld [vmem:[#allocation2 + $0x1] sm:$0xff]
        %v1440 = vld [vmem:[#allocation2 + $0x9] sm:$0xff]
        %v1441 = vld [vmem:[#allocation3 + $0x1] sm:$0xff]
        %v1442 = vld [vmem:[#allocation3 + $0x9] sm:$0xff]
        %v1443 = vmul.f32 %v1441, %v1417
        %v1444 = vmul.f32 %v1442, %v1418
        %v1445 = vmul.f32 %v1439, 6.623413
        %v1446 = vmul.f32 %v1440, 6.623413
        %v1447 = vmin.f32 %v1443, %v1445
        %v1448 = vmin.f32 %v1444, %v1446
        %v1449 = vadd.f32 %v1429, %v1447
        %v1450 = vadd.f32 %v1430, %v1448
        %v1451 = vmul.f32 %v1447, %v1447
        %v1452 = vmul.f32 %v1448, %v1448
        %v1453 = vadd.f32 %v1433, %v1451
        %v1454 = vadd.f32 %v1434, %v1452
        %v1455 = vmul.f32 %v1439, %v1447
        %v1456 = vmul.f32 %v1440, %v1448
        %v1457 = vadd.f32 %v1437, %v1455
        %v1458 = vadd.f32 %v1438, %v1456
        %v1459 = vld [vmem:[#allocation2 + $0x2] sm:$0xff]
        %v1460 = vld [vmem:[#allocation2 + $0xa] sm:$0xff]
        %v1461 = vld [vmem:[#allocation3 + $0x2] sm:$0xff]
        %v1462 = vld [vmem:[#allocation3 + $0xa] sm:$0xff]
        %v1463 = vmul.f32 %v1461, %v1417
        %v1464 = vmul.f32 %v1462, %v1418
        %v1465 = vmul.f32 %v1459, 6.623413
        %v1466 = vmul.f32 %v1460, 6.623413
        %v1467 = vmin.f32 %v1463, %v1465
        %v1468 = vmin.f32 %v1464, %v1466
        %v1469 = vadd.f32 %v1449, %v1467
        %v1470 = vadd.f32 %v1450, %v1468
        %v1471 = vmul.f32 %v1467, %v1467
        %v1472 = vmul.f32 %v1468, %v1468
        %v1473 = vadd.f32 %v1453, %v1471
        %v1474 = vadd.f32 %v1454, %v1472
        %v1475 = vmul.f32 %v1459, %v1467
        %v1476 = vmul.f32 %v1460, %v1468
        %v1477 = vadd.f32 %v1457, %v1475
        %v1478 = vadd.f32 %v1458, %v1476
        %v1479 = vld [vmem:[#allocation2 + $0x3] sm:$0xff]
        %v1480 = vld [vmem:[#allocation2 + $0xb] sm:$0xff]
        %v1481 = vld [vmem:[#allocation3 + $0x3] sm:$0xff]
        %v1482 = vld [vmem:[#allocation3 + $0xb] sm:$0xff]
        %v1483 = vmul.f32 %v1481, %v1417
        %v1484 = vmul.f32 %v1482, %v1418
        %v1485 = vmul.f32 %v1479, 6.623413
        %v1486 = vmul.f32 %v1480, 6.623413
        %v1487 = vmin.f32 %v1483, %v1485
        %v1488 = vmin.f32 %v1484, %v1486
        %v1489 = vadd.f32 %v1469, %v1487
        %v1490 = vadd.f32 %v1470, %v1488
        %v1491 = vmul.f32 %v1487, %v1487
        %v1492 = vmul.f32 %v1488, %v1488
        %v1493 = vadd.f32 %v1473, %v1491
        %v1494 = vadd.f32 %v1474, %v1492
        %v1495 = vmul.f32 %v1479, %v1487
        %v1496 = vmul.f32 %v1480, %v1488
        %v1497 = vadd.f32 %v1477, %v1495
        %v1498 = vadd.f32 %v1478, %v1496
        %v1499 = vld [vmem:[#allocation2 + $0x4] sm:$0xff]
        %v1500 = vld [vmem:[#allocation2 + $0xc] sm:$0xff]
        %v1501 = vld [vmem:[#allocation3 + $0x4] sm:$0xff]
        %v1502 = vld [vmem:[#allocation3 + $0xc] sm:$0xff]
        %v1503 = vmul.f32 %v1501, %v1417
        %v1504 = vmul.f32 %v1502, %v1418
        %v1505 = vmul.f32 %v1499, 6.623413
        %v1506 = vmul.f32 %v1500, 6.623413
        %v1507 = vmin.f32 %v1503, %v1505
        %v1508 = vmin.f32 %v1504, %v1506
        %v1509 = vadd.f32 %v1489, %v1507
        %v1510 = vadd.f32 %v1490, %v1508
        %v1511 = vmul.f32 %v1507, %v1507
        %v1512 = vmul.f32 %v1508, %v1508
        %v1513 = vadd.f32 %v1493, %v1511
        %v1514 = vadd.f32 %v1494, %v1512
        %v1515 = vmul.f32 %v1499, %v1507
        %v1516 = vmul.f32 %v1500, %v1508
        %v1517 = vadd.f32 %v1497, %v1515
        %v1518 = vadd.f32 %v1498, %v1516
        %v1519 = vld [vmem:[#allocation2 + $0x5] sm:$0xff]
        %v1520 = vld [vmem:[#allocation2 + $0xd] sm:$0xff]
        %v1521 = vld [vmem:[#allocation3 + $0x5] sm:$0xff]
        %v1522 = vld [vmem:[#allocation3 + $0xd] sm:$0xff]
        %v1523 = vmul.f32 %v1521, %v1417
        %v1524 = vmul.f32 %v1522, %v1418
        %v1525 = vmul.f32 %v1519, 6.623413
        %v1526 = vmul.f32 %v1520, 6.623413
        %v1527 = vmin.f32 %v1523, %v1525
        %v1528 = vmin.f32 %v1524, %v1526
        %v1529 = vadd.f32 %v1509, %v1527
        %v1530 = vadd.f32 %v1510, %v1528
        %v1531 = vmul.f32 %v1527, %v1527
        %v1532 = vmul.f32 %v1528, %v1528
        %v1533 = vadd.f32 %v1513, %v1531
        %v1534 = vadd.f32 %v1514, %v1532
        %v1535 = vmul.f32 %v1519, %v1527
        %v1536 = vmul.f32 %v1520, %v1528
        %v1537 = vadd.f32 %v1517, %v1535
        %v1538 = vadd.f32 %v1518, %v1536
        %v1539 = vld [vmem:[#allocation2 + $0x6] sm:$0xff]
        %v1540 = vld [vmem:[#allocation2 + $0xe] sm:$0xff]
        %v1541 = vld [vmem:[#allocation3 + $0x6] sm:$0xff]
        %v1542 = vld [vmem:[#allocation3 + $0xe] sm:$0xff]
        %v1543 = vmul.f32 %v1541, %v1417
        %v1544 = vmul.f32 %v1542, %v1418
        %v1545 = vmul.f32 %v1539, 6.623413
        %v1546 = vmul.f32 %v1540, 6.623413
        %v1547 = vmin.f32 %v1543, %v1545
        %v1548 = vmin.f32 %v1544, %v1546
        %v1549 = vadd.f32 %v1529, %v1547
        %v1550 = vadd.f32 %v1530, %v1548
        %v1551 = vmul.f32 %v1547, %v1547
        %v1552 = vmul.f32 %v1548, %v1548
        %v1553 = vadd.f32 %v1533, %v1551
        %v1554 = vadd.f32 %v1534, %v1552
        %v1555 = vmul.f32 %v1539, %v1547
        %v1556 = vmul.f32 %v1540, %v1548
        %v1557 = vadd.f32 %v1537, %v1555
        %v1558 = vadd.f32 %v1538, %v1556
        %v1559 = vld [vmem:[#allocation2 + $0x7] sm:$0xff]
        %v1560 = vld [vmem:[#allocation2 + $0xf] sm:$0xff]
        %v1561 = vld [vmem:[#allocation3 + $0x7] sm:$0xff]
        %v1562 = vld [vmem:[#allocation3 + $0xf] sm:$0xff]
        %v1563 = vmul.f32 %v1561, %v1417
        %v1564 = vmul.f32 %v1562, %v1418
        %v1565 = vmul.f32 %v1559, 6.623413
        %v1566 = vmul.f32 %v1560, 6.623413
        %v1567 = vmin.f32 %v1563, %v1565
        %v1568 = vmin.f32 %v1564, %v1566
        %v1569 = vadd.f32 %v1549, %v1567
        %v1570 = vadd.f32 %v1550, %v1568
        %v1571 = vmul.f32 %v1567, %v1567
        %v1572 = vmul.f32 %v1568, %v1568
        %v1573 = vadd.f32 %v1553, %v1571
        %v1574 = vadd.f32 %v1554, %v1572
        %v1575 = vmul.f32 %v1559, %v1567
        %v1576 = vmul.f32 %v1560, %v1568
        %v1577 = vadd.f32 %v1557, %v1575
        %v1578 = vadd.f32 %v1558, %v1576
        %v1579 = vld [vmem:[#allocation2 + $0x10] sm:$0xff]
        %v1580 = vld [vmem:[#allocation3 + $0x10] sm:$0xff]
        %v1581 = vmul.f32 %v1422, %v1417
        %v1582 = vmul.f32 %v1580, %v1418
        %v1583 = vmul.f32 %v1579, 6.623413
        %v1584 = vmin.f32 %v1581, %v1426
        %v1585 = vmin.f32 %v1582, %v1583
        %v1586 = vadd.f32 %v1569, %v1584
        %v1587 = vadd.f32 %v1570, %v1585
        %v1588 = vmul.f32 %v1584, %v1584
        %v1589 = vmul.f32 %v1585, %v1585
        %v1590 = vadd.f32 %v1573, %v1588
        %v1591 = vadd.f32 %v1574, %v1589
        %v1592 = vmul.f32 %v1420, %v1584
        %v1593 = vmul.f32 %v1579, %v1585
        %v1594 = vadd.f32 %v1577, %v1592
        %v1595 = vadd.f32 %v1578, %v1593
        %v1596 = vld [vmem:[#allocation2 + $0x11] sm:$0xff]
        %v1597 = vld [vmem:[#allocation3 + $0x11] sm:$0xff]
        %v1598 = vmul.f32 %v1442, %v1417
        %v1599 = vmul.f32 %v1597, %v1418
        %v1600 = vmul.f32 %v1596, 6.623413
        %v1601 = vmin.f32 %v1598, %v1446
        %v1602 = vmin.f32 %v1599, %v1600
        %v1603 = vadd.f32 %v1586, %v1601
        %v1604 = vadd.f32 %v1587, %v1602
        %v1605 = vmul.f32 %v1601, %v1601
        %v1606 = vmul.f32 %v1602, %v1602
        %v1607 = vadd.f32 %v1590, %v1605
        %v1608 = vadd.f32 %v1591, %v1606
        %v1609 = vmul.f32 %v1440, %v1601
        %v1610 = vmul.f32 %v1596, %v1602
        %v1611 = vadd.f32 %v1594, %v1609
        %v1612 = vadd.f32 %v1595, %v1610
        %v1613 = vld [vmem:[#allocation2 + $0x12] sm:$0xff]
        %v1614 = vld [vmem:[#allocation3 + $0x12] sm:$0xff]
        %v1615 = vmul.f32 %v1462, %v1417
        %v1616 = vmul.f32 %v1614, %v1418
        %v1617 = vmul.f32 %v1613, 6.623413
        %v1618 = vmin.f32 %v1615, %v1466
        %v1619 = vmin.f32 %v1616, %v1617
        %v1620 = vadd.f32 %v1603, %v1618
        %v1621 = vadd.f32 %v1604, %v1619
        %v1622 = vmul.f32 %v1618, %v1618
        %v1623 = vmul.f32 %v1619, %v1619
        %v1624 = vadd.f32 %v1607, %v1622
        %v1625 = vadd.f32 %v1608, %v1623
        %v1626 = vmul.f32 %v1460, %v1618
        %v1627 = vmul.f32 %v1613, %v1619
        %v1628 = vadd.f32 %v1611, %v1626
        %v1629 = vadd.f32 %v1612, %v1627
        %v1630 = vld [vmem:[#allocation2 + $0x13] sm:$0xff]
        %v1631 = vld [vmem:[#allocation3 + $0x13] sm:$0xff]
        %v1632 = vmul.f32 %v1482, %v1417
        %v1633 = vmul.f32 %v1631, %v1418
        %v1634 = vmul.f32 %v1630, 6.623413
        %v1635 = vmin.f32 %v1632, %v1486
        %v1636 = vmin.f32 %v1633, %v1634
        %v1637 = vadd.f32 %v1620, %v1635
        %v1638 = vadd.f32 %v1621, %v1636
        %v1639 = vmul.f32 %v1635, %v1635
        %v1640 = vmul.f32 %v1636, %v1636
        %v1641 = vadd.f32 %v1624, %v1639
        %v1642 = vadd.f32 %v1625, %v1640
        %v1643 = vmul.f32 %v1480, %v1635
        %v1644 = vmul.f32 %v1630, %v1636
        %v1645 = vadd.f32 %v1628, %v1643
        %v1646 = vadd.f32 %v1629, %v1644
        %v1647 = vld [vmem:[#allocation2 + $0x14] sm:$0xff]
        %v1648 = vld [vmem:[#allocation3 + $0x14] sm:$0xff]
        %v1649 = vmul.f32 %v1502, %v1417
        %v1650 = vmul.f32 %v1648, %v1418
        %v1651 = vmul.f32 %v1647, 6.623413
        %v1652 = vmin.f32 %v1649, %v1506
        %v1653 = vmin.f32 %v1650, %v1651
        %v1654 = vadd.f32 %v1637, %v1652
        %v1655 = vadd.f32 %v1638, %v1653
        %v1656 = vmul.f32 %v1652, %v1652
        %v1657 = vmul.f32 %v1653, %v1653
        %v1658 = vadd.f32 %v1641, %v1656
        %v1659 = vadd.f32 %v1642, %v1657
        %v1660 = vmul.f32 %v1500, %v1652
        %v1661 = vmul.f32 %v1647, %v1653
        %v1662 = vadd.f32 %v1645, %v1660
        %v1663 = vadd.f32 %v1646, %v1661
        %v1664 = vld [vmem:[#allocation2 + $0x15] sm:$0xff]
        %v1665 = vld [vmem:[#allocation3 + $0x15] sm:$0xff]
        %v1666 = vmul.f32 %v1522, %v1417
        %v1667 = vmul.f32 %v1665, %v1418
        %v1668 = vmul.f32 %v1664, 6.623413
        %v1669 = vmin.f32 %v1666, %v1526
        %v1670 = vmin.f32 %v1667, %v1668
        %v1671 = vadd.f32 %v1654, %v1669
        %v1672 = vadd.f32 %v1655, %v1670
        %v1673 = vmul.f32 %v1669, %v1669
        %v1674 = vmul.f32 %v1670, %v1670
        %v1675 = vadd.f32 %v1658, %v1673
        %v1676 = vadd.f32 %v1659, %v1674
        %v1677 = vmul.f32 %v1520, %v1669
        %v1678 = vmul.f32 %v1664, %v1670
        %v1679 = vadd.f32 %v1662, %v1677
        %v1680 = vadd.f32 %v1663, %v1678
        %v1681 = vld [vmem:[#allocation2 + $0x16] sm:$0xff]
        %v1682 = vld [vmem:[#allocation3 + $0x16] sm:$0xff]
        %v1683 = vmul.f32 %v1542, %v1417
        %v1684 = vmul.f32 %v1682, %v1418
        %v1685 = vmul.f32 %v1681, 6.623413
        %v1686 = vmin.f32 %v1683, %v1546
        %v1687 = vmin.f32 %v1684, %v1685
        %v1688 = vadd.f32 %v1671, %v1686
        %v1689 = vadd.f32 %v1672, %v1687
        %v1690 = vmul.f32 %v1686, %v1686
        %v1691 = vmul.f32 %v1687, %v1687
        %v1692 = vadd.f32 %v1675, %v1690
        %v1693 = vadd.f32 %v1676, %v1691
        %v1694 = vmul.f32 %v1540, %v1686
        %v1695 = vmul.f32 %v1681, %v1687
        %v1696 = vadd.f32 %v1679, %v1694
        %v1697 = vadd.f32 %v1680, %v1695
        %v1698 = vld [vmem:[#allocation2 + $0x17] sm:$0xff]
        %v1699 = vld [vmem:[#allocation3 + $0x17] sm:$0xff]
        %v1700 = vmul.f32 %v1562, %v1417
        %v1701 = vmul.f32 %v1699, %v1418
        %v1702 = vmul.f32 %v1698, 6.623413
        %v1703 = vmin.f32 %v1700, %v1566
        %v1704 = vmin.f32 %v1701, %v1702
        %v1705 = vadd.f32 %v1688, %v1703
        %v1706 = vadd.f32 %v1689, %v1704
        %v1707 = vmul.f32 %v1703, %v1703
        %v1708 = vmul.f32 %v1704, %v1704
        %v1709 = vadd.f32 %v1692, %v1707
        %v1710 = vadd.f32 %v1693, %v1708
        %v1711 = vmul.f32 %v1560, %v1703
        %v1712 = vmul.f32 %v1698, %v1704
        %v1713 = vadd.f32 %v1696, %v1711
        %v1714 = vadd.f32 %v1697, %v1712
        %v1715 = vld [vmem:[#allocation2 + $0x18] sm:$0xff]
        %v1716 = vld [vmem:[#allocation3 + $0x18] sm:$0xff]
        %v1717 = vmul.f32 %v1580, %v1417
        %v1718 = vmul.f32 %v1716, %v1418
        %v1719 = vmul.f32 %v1715, 6.623413
        %v1720 = vmin.f32 %v1717, %v1583
        %v1721 = vmin.f32 %v1718, %v1719
        %v1722 = vadd.f32 %v1705, %v1720
        %v1723 = vadd.f32 %v1706, %v1721
        %v1724 = vmul.f32 %v1720, %v1720
        %v1725 = vmul.f32 %v1721, %v1721
        %v1726 = vadd.f32 %v1709, %v1724
        %v1727 = vadd.f32 %v1710, %v1725
        %v1728 = vmul.f32 %v1579, %v1720
        %v1729 = vmul.f32 %v1715, %v1721
        %v1730 = vadd.f32 %v1713, %v1728
        %v1731 = vadd.f32 %v1714, %v1729
        %v1732 = vld [vmem:[#allocation2 + $0x19] sm:$0xff]
        %v1733 = vld [vmem:[#allocation3 + $0x19] sm:$0xff]
        %v1734 = vmul.f32 %v1597, %v1417
        %v1735 = vmul.f32 %v1733, %v1418
        %v1736 = vmul.f32 %v1732, 6.623413
        %v1737 = vmin.f32 %v1734, %v1600
        %v1738 = vmin.f32 %v1735, %v1736
        %v1739 = vadd.f32 %v1722, %v1737
        %v1740 = vadd.f32 %v1723, %v1738
        %v1741 = vmul.f32 %v1737, %v1737
        %v1742 = vmul.f32 %v1738, %v1738
        %v1743 = vadd.f32 %v1726, %v1741
        %v1744 = vadd.f32 %v1727, %v1742
        %v1745 = vmul.f32 %v1596, %v1737
        %v1746 = vmul.f32 %v1732, %v1738
        %v1747 = vadd.f32 %v1730, %v1745
        %v1748 = vadd.f32 %v1731, %v1746
        %v1749 = vld [vmem:[#allocation2 + $0x1a] sm:$0xff]
        %v1750 = vld [vmem:[#allocation3 + $0x1a] sm:$0xff]
        %v1751 = vmul.f32 %v1614, %v1417
        %v1752 = vmul.f32 %v1750, %v1418
        %v1753 = vmul.f32 %v1749, 6.623413
        %v1754 = vmin.f32 %v1751, %v1617
        %v1755 = vmin.f32 %v1752, %v1753
        %v1756 = vadd.f32 %v1739, %v1754
        %v1757 = vadd.f32 %v1740, %v1755
        %v1758 = vmul.f32 %v1754, %v1754
        %v1759 = vmul.f32 %v1755, %v1755
        %v1760 = vadd.f32 %v1743, %v1758
        %v1761 = vadd.f32 %v1744, %v1759
        %v1762 = vmul.f32 %v1613, %v1754
        %v1763 = vmul.f32 %v1749, %v1755
        %v1764 = vadd.f32 %v1747, %v1762
        %v1765 = vadd.f32 %v1748, %v1763
        %v1766 = vld [vmem:[#allocation2 + $0x1b] sm:$0xff]
        %v1767 = vld [vmem:[#allocation3 + $0x1b] sm:$0xff]
        %v1768 = vmul.f32 %v1631, %v1417
        %v1769 = vmul.f32 %v1767, %v1418
        %v1770 = vmul.f32 %v1766, 6.623413
        %v1771 = vmin.f32 %v1768, %v1634
        %v1772 = vmin.f32 %v1769, %v1770
        %v1773 = vadd.f32 %v1756, %v1771
        %v1774 = vadd.f32 %v1757, %v1772
        %v1775 = vmul.f32 %v1771, %v1771
        %v1776 = vmul.f32 %v1772, %v1772
        %v1777 = vadd.f32 %v1760, %v1775
        %v1778 = vadd.f32 %v1761, %v1776
        %v1779 = vmul.f32 %v1630, %v1771
        %v1780 = vmul.f32 %v1766, %v1772
        %v1781 = vadd.f32 %v1764, %v1779
        %v1782 = vadd.f32 %v1765, %v1780
        %v1783 = vld [vmem:[#allocation2 + $0x1c] sm:$0xff]
        %v1784 = vld [vmem:[#allocation3 + $0x1c] sm:$0xff]
        %v1785 = vmul.f32 %v1648, %v1417
        %v1786 = vmul.f32 %v1784, %v1418
        %v1787 = vmul.f32 %v1783, 6.623413
        %v1788 = vmin.f32 %v1785, %v1651
        %v1789 = vmin.f32 %v1786, %v1787
        %v1790 = vadd.f32 %v1773, %v1788
        %v1791 = vadd.f32 %v1774, %v1789
        %v1792 = vmul.f32 %v1788, %v1788
        %v1793 = vmul.f32 %v1789, %v1789
        %v1794 = vadd.f32 %v1777, %v1792
        %v1795 = vadd.f32 %v1778, %v1793
        %v1796 = vmul.f32 %v1647, %v1788
        %v1797 = vmul.f32 %v1783, %v1789
        %v1798 = vadd.f32 %v1781, %v1796
        %v1799 = vadd.f32 %v1782, %v1797
        %v1800 = vld [vmem:[#allocation2 + $0x1d] sm:$0xff]
        %v1801 = vld [vmem:[#allocation3 + $0x1d] sm:$0xff]
        %v1802 = vmul.f32 %v1665, %v1417
        %v1803 = vmul.f32 %v1801, %v1418
        %v1804 = vmul.f32 %v1800, 6.623413
        %v1805 = vmin.f32 %v1802, %v1668
        %v1806 = vmin.f32 %v1803, %v1804
        %v1807 = vadd.f32 %v1790, %v1805
        %v1808 = vadd.f32 %v1791, %v1806
        %v1809 = vmul.f32 %v1805, %v1805
        %v1810 = vmul.f32 %v1806, %v1806
        %v1811 = vadd.f32 %v1794, %v1809
        %v1812 = vadd.f32 %v1795, %v1810
        %v1813 = vmul.f32 %v1664, %v1805
        %v1814 = vmul.f32 %v1800, %v1806
        %v1815 = vadd.f32 %v1798, %v1813
        %v1816 = vadd.f32 %v1799, %v1814
        %v1817 = vld [vmem:[#allocation2 + $0x1e] sm:$0xff]
        %v1818 = vld [vmem:[#allocation3 + $0x1e] sm:$0xff]
        %v1819 = vmul.f32 %v1682, %v1417
        %v1820 = vmul.f32 %v1818, %v1418
        %v1821 = vmul.f32 %v1817, 6.623413
        %v1822 = vmin.f32 %v1819, %v1685
        %v1823 = vmin.f32 %v1820, %v1821
        %v1824 = vadd.f32 %v1807, %v1822
        %v1825 = vadd.f32 %v1808, %v1823
        %v1826 = vmul.f32 %v1822, %v1822
        %v1827 = vmul.f32 %v1823, %v1823
        %v1828 = vadd.f32 %v1811, %v1826
        %v1829 = vadd.f32 %v1812, %v1827
        %v1830 = vmul.f32 %v1681, %v1822
        %v1831 = vmul.f32 %v1817, %v1823
        %v1832 = vadd.f32 %v1815, %v1830
        %v1833 = vadd.f32 %v1816, %v1831
        %v1834 = vld [vmem:[#allocation2 + $0x1f] sm:$0xff]
        %v1835 = vld [vmem:[#allocation3 + $0x1f] sm:$0xff]
        %v1836 = vmul.f32 %v1699, %v1417
        %v1837 = vmul.f32 %v1835, %v1418
        %v1838 = vmul.f32 %v1834, 6.623413
        %v1839 = vmin.f32 %v1836, %v1702
        %v1840 = vmin.f32 %v1837, %v1838
        %v1841 = vadd.f32 %v1824, %v1839
        %v1842 = vadd.f32 %v1825, %v1840
        %v1843 = vmul.f32 %v1839, %v1839
        %v1844 = vmul.f32 %v1840, %v1840
        %v1845 = vadd.f32 %v1828, %v1843
        %v1846 = vadd.f32 %v1829, %v1844
        %v1847 = vmul.f32 %v1698, %v1839
        %v1848 = vmul.f32 %v1834, %v1840
        %v1849 = vadd.f32 %v1832, %v1847
        %v1850 = vadd.f32 %v1833, %v1848
        %v1851 = vmul.f32 %v1155, %v1417
        %v1852 = vmul.f32 %v1156, %v1418
        %v1853 = vmul.f32 %v1150, 6.623413
        %v1854 = vmul.f32 %v1151, 6.623413
        %v1855 = vmin.f32 %v1851, %v1853
        %v1856 = vmin.f32 %v1852, %v1854
        %v1857 = vadd.f32 %v1841, %v1855
        %v1858 = vadd.f32 %v1842, %v1856
        %v1859 = vmul.f32 %v1855, %v1855
        %v1860 = vmul.f32 %v1856, %v1856
        %v1861 = vadd.f32 %v1845, %v1859
        %v1862 = vadd.f32 %v1846, %v1860
        %v1863 = vmul.f32 %v1150, %v1855
        %v1864 = vmul.f32 %v1151, %v1856
        %v1865 = vadd.f32 %v1849, %v1863
        %v1866 = vadd.f32 %v1850, %v1864
        %v1867 = vld [vmem:[#allocation2 + $0x21] sm:$0xff]
        %v1868 = vld [vmem:[#allocation3 + $0x21] sm:$0xff]
        %v1869 = vmul.f32 %v1733, %v1417
        %v1870 = vmul.f32 %v1868, %v1418
        %v1871 = vmul.f32 %v1867, 6.623413
        %v1872 = vmin.f32 %v1869, %v1736
        %v1873 = vmin.f32 %v1870, %v1871
        %v1874 = vadd.f32 %v1857, %v1872
        %v1875 = vadd.f32 %v1858, %v1873
        %v1876 = vmul.f32 %v1872, %v1872
        %v1877 = vmul.f32 %v1873, %v1873
        %v1878 = vadd.f32 %v1861, %v1876
        %v1879 = vadd.f32 %v1862, %v1877
        %v1880 = vmul.f32 %v1732, %v1872
        %v1881 = vmul.f32 %v1867, %v1873
        %v1882 = vadd.f32 %v1865, %v1880
        %v1883 = vadd.f32 %v1866, %v1881
        %v1884 = vld [vmem:[#allocation2 + $0x22] sm:$0xff]
        %v1885 = vld [vmem:[#allocation3 + $0x22] sm:$0xff]
        %v1886 = vmul.f32 %v1750, %v1417
        %v1887 = vmul.f32 %v1885, %v1418
        %v1888 = vmul.f32 %v1884, 6.623413
        %v1889 = vmin.f32 %v1886, %v1753
        %v1890 = vmin.f32 %v1887, %v1888
        %v1891 = vadd.f32 %v1874, %v1889
        %v1892 = vadd.f32 %v1875, %v1890
        %v1893 = vmul.f32 %v1889, %v1889
        %v1894 = vmul.f32 %v1890, %v1890
        %v1895 = vadd.f32 %v1878, %v1893
        %v1896 = vadd.f32 %v1879, %v1894
        %v1897 = vmul.f32 %v1749, %v1889
        %v1898 = vmul.f32 %v1884, %v1890
        %v1899 = vadd.f32 %v1882, %v1897
        %v1900 = vadd.f32 %v1883, %v1898
        %v1901 = vld [vmem:[#allocation2 + $0x23] sm:$0xff]
        %v1902 = vld [vmem:[#allocation3 + $0x23] sm:$0xff]
        %v1903 = vmul.f32 %v1767, %v1417
        %v1904 = vmul.f32 %v1902, %v1418
        %v1905 = vmul.f32 %v1901, 6.623413
        %v1906 = vmin.f32 %v1903, %v1770
        %v1907 = vmin.f32 %v1904, %v1905
        %v1908 = vadd.f32 %v1891, %v1906
        %v1909 = vadd.f32 %v1892, %v1907
        %v1910 = vmul.f32 %v1906, %v1906
        %v1911 = vmul.f32 %v1907, %v1907
        %v1912 = vadd.f32 %v1895, %v1910
        %v1913 = vadd.f32 %v1896, %v1911
        %v1914 = vmul.f32 %v1766, %v1906
        %v1915 = vmul.f32 %v1901, %v1907
        %v1916 = vadd.f32 %v1899, %v1914
        %v1917 = vadd.f32 %v1900, %v1915
        %v1918 = vld [vmem:[#allocation2 + $0x24] sm:$0xff]
        %v1919 = vld [vmem:[#allocation3 + $0x24] sm:$0xff]
        %v1920 = vmul.f32 %v1784, %v1417
        %v1921 = vmul.f32 %v1919, %v1418
        %v1922 = vmul.f32 %v1918, 6.623413
        %v1923 = vmin.f32 %v1920, %v1787
        %v1924 = vmin.f32 %v1921, %v1922
        %v1925 = vadd.f32 %v1908, %v1923
        %v1926 = vadd.f32 %v1909, %v1924
        %v1927 = vmul.f32 %v1923, %v1923
        %v1928 = vmul.f32 %v1924, %v1924
        %v1929 = vadd.f32 %v1912, %v1927
        %v1930 = vadd.f32 %v1913, %v1928
        %v1931 = vmul.f32 %v1783, %v1923
        %v1932 = vmul.f32 %v1918, %v1924
        %v1933 = vadd.f32 %v1916, %v1931
        %v1934 = vadd.f32 %v1917, %v1932
        %v1935 = vld [vmem:[#allocation2 + $0x25] sm:$0xff]
        %v1936 = vld [vmem:[#allocation3 + $0x25] sm:$0xff]
        %v1937 = vmul.f32 %v1801, %v1417
        %v1938 = vmul.f32 %v1936, %v1418
        %v1939 = vmul.f32 %v1935, 6.623413
        %v1940 = vmin.f32 %v1937, %v1804
        %v1941 = vmin.f32 %v1938, %v1939
        %v1942 = vadd.f32 %v1925, %v1940
        %v1943 = vadd.f32 %v1926, %v1941
        %v1944 = vmul.f32 %v1940, %v1940
        %v1945 = vmul.f32 %v1941, %v1941
        %v1946 = vadd.f32 %v1929, %v1944
        %v1947 = vadd.f32 %v1930, %v1945
        %v1948 = vmul.f32 %v1800, %v1940
        %v1949 = vmul.f32 %v1935, %v1941
        %v1950 = vadd.f32 %v1933, %v1948
        %v1951 = vadd.f32 %v1934, %v1949
        %v1952 = vmul.f32 %v1233, 0.033333335
        %v1953 = vmul.f32 %v1238, 0.033333335
        %v1954 = vmul.f32 %v1942, 0.033333335
        %v1955 = vmul.f32 %v1943, 0.033333335
        %v1956 = vmul.f32 %v1233, %v1954
        %v1957 = vmul.f32 %v1238, %v1955
        %v1958 = vsub.f32 %v1950, %v1956
        %v1959 = vsub.f32 %v1951, %v1957
        %v1960 = vmul.f32 %v1233, %v1952
        %v1961 = vmul.f32 %v1238, %v1953
        %v1962 = vsub.f32 %v1313, %v1960
        %v1963 = vsub.f32 %v1318, %v1961
        %v1964 = vmax.f32 %v1962, 0.0
        %v1965 = vmax.f32 %v1963, 0.0
        %v1966 = vmul.f32 %v1942, %v1954
        %v1967 = vmul.f32 %v1943, %v1955
        %v1968 = vsub.f32 %v1946, %v1966
        %v1969 = vsub.f32 %v1947, %v1967
        %v1970 = vmax.f32 %v1968, 0.0
        %v1971 = vmax.f32 %v1969, 0.0
        %v1972 = vmul.f32 %v1964, %v1970
        %v1973 = vmul.f32 %v1965, %v1971
        %v1974 = vadd.f32 %v1972, 1e-08
        %v1975 = vadd.f32 %v1973, 1e-08
        %v1976 = vrsqrt.pop %v1974
        %v1977 = vrsqrt.pop %v1975
        %v1978 = vmul.f32 %v1958, %v1976
        %v1979 = vmul.f32 %v1959, %v1977
        %v1980 = vlaneseq
        %v1981 = vshrl.u32 %v1980, 7
        %v1982 = vadd.s32 %v1981, 8
        %vm1983 = vcmp.lt.s32.totalorder %v1981, 9
        %vm1984 = vcmp.lt.s32.totalorder %v1982, 9
        %v1985 = vsel %vm1983, %v1978, 0.0
        %v1986 = vsel %vm1984, %v1979, 0.0
        %v1987 = vld [vmem:[%s4] sm:$0xff]
        %v1988 = vld [vmem:[%s4 + $0x8] sm:$0xff]
        %v1990 = vsel %vm237, %v1985, 0
        %v1993 = vsel %vm237, %v1986, 0
        %1995 = vmatprep.subr.mxu0 0.0
        %1996 = vmatpush1.msra.mxu0 %v1987
        %1997 = vmatprep.subr.mxu0 0.0
        %1998 = vmatpush1.msra.mxu0 %v1988
        %1999 = vmatprep.subr.mxu0 0.0
        %2000 = vmatpush1.msra.mxu0 0.0
        %2001 = vmatprep.subr.mxu0 0.0
        %2002 = vmatpush1.msra.mxu0 0.0
        %2003 = vmatprep.subr.mxu0 0.0
        %2004 = vmatpush1.msra.mxu0 0.0
        %2005 = vmatprep.subr.mxu0 0.0
        %2006 = vmatpush1.msra.mxu0 0.0
        %2007 = vmatprep.subr.mxu0 0.0
        %2008 = vmatpush1.msra.mxu0 0.0
        %2009 = vmatprep.subr.mxu0 0.0
        %2010 = vmatpush1.msra.mxu0 0.0
        %2011 = vmatprep.subr.mxu0 0.0
        %2012 = vmatpush1.msra.mxu0 0.0
        %2013 = vmatprep.subr.mxu0 0.0
        %2014 = vmatpush1.msra.mxu0 0.0
        %2015 = vmatprep.subr.mxu0 0.0
        %2016 = vmatpush1.msra.mxu0 0.0
        %2017 = vmatprep.subr.mxu0 0.0
        %2018 = vmatpush1.msra.mxu0 0.0
        %2019 = vmatprep.subr.mxu0 0.0
        %2020 = vmatpush1.msra.mxu0 0.0
        %2021 = vmatprep.subr.mxu0 0.0
        %2022 = vmatpush1.msra.mxu0 0.0
        %2023 = vmatprep.subr.mxu0 0.0
        %2024 = vmatpush1.msra.mxu0 0.0
        %2025 = vmatprep.subr.mxu0 0.0
        %2026 = vmatpush1.msra.mxu0 0.0
        %2027 = vmatprep.subr.mxu0 0.0
        %2028 = vmatpush1.msra.mxu0 0.0
        %2029 = vmatprep.subr.mxu0 0.0
        %2030 = vmatpush1.msra.mxu0 0.0
        %2031 = vmatprep.subr.mxu0 0.0
        %2032 = vmatpush1.msra.mxu0 0.0
        %2033 = vmatprep.subr.mxu0 0.0
        %2034 = vmatpush1.msra.mxu0 0.0
        %2035 = vmatprep.subr.mxu0 0.0
        %2036 = vmatpush1.msra.mxu0 0.0
        %2037 = vmatprep.subr.mxu0 0.0
        %2038 = vmatpush1.msra.mxu0 0.0
        %2039 = vmatprep.subr.mxu0 0.0
        %2040 = vmatpush1.msra.mxu0 0.0
        %2041 = vmatprep.subr.mxu0 0.0
        %2042 = vmatpush1.msra.mxu0 0.0
        %2043 = vmatprep.subr.mxu0 0.0
        %2044 = vmatpush1.msra.mxu0 0.0
        %2045 = vmatprep.subr.mxu0 0.0
        %2046 = vmatpush1.msra.mxu0 0.0
        %2047 = vmatprep.subr.mxu0 0.0
        %2048 = vmatpush1.msra.mxu0 0.0
        %2049 = vmatprep.subr.mxu0 0.0
        %2050 = vmatpush1.msra.mxu0 0.0
        %2051 = vmatprep.subr.mxu0 0.0
        %2052 = vmatpush1.msra.mxu0 0.0
        %2053 = vmatprep.subr.mxu0 0.0
        %2054 = vmatpush1.msra.mxu0 0.0
        %2055 = vmatprep.subr.mxu0 0.0
        %2056 = vmatpush1.msra.mxu0 0.0
        %2057 = vmatprep.subr.mxu0 0.0
        %2058 = vmatpush1.msra.mxu0 0.0
        %2059 = vmatprep.mubr.f32.mxu0 0.0
        %2060 = vmatmul.mubr.f32.gmra.mrb[0].mxu0 %v1990
        %v2061 = vpop.f32.mrb[0].mxu0
        %v2062 = vadd.f32 0.0, %v2061
        %v2063 = vpop.f32.mrb[0].mxu0
        %2064 = vmatprep.mubr.f32.mxu0 0.0
        %2065 = vmatmul.mubr.f32.gmra.mrb[0].mxu0 %v1993
        %v2066 = vpop.f32.mrb[0].mxu0
        %v2067 = vadd.f32 0.0, %v2066
        %v2068 = vpop.f32.mrb[0].mxu0
        %2069 = vdwg.mxu0
        %v2070 = vadd.f32 %v2062, %v2067
        %v2071 = vrot.slane %v2070, 4
        %v2072 = vadd.f32 %v2070, %v2071
        %v2073 = vrot.slane %v2072, 2
        %v2074 = vadd.f32 %v2072, %v2073
        %v2075 = vrot.slane %v2074, 1
        %v2076 = vadd.f32 %v2074, %v2075
        %v2077 = vmul.f32 %v2076, 0.0074074073
        %2078 = vst [vmem:[%s231] sm:$0x1] %v2077
        %s2079 = sand.u32 %s138, 1
        %s2080 = scalar_lea.sflag [#allocation6], %s2079
        %s2081 = sand.u32 %s138, 1
        %s2082 = scalar_lea.vmem [#allocation7], %s2081
        // Predicated region
        $region45: #{tpu_custom_call.1} parent=39 // pred_check
          %p2083 = pneg %p148
        $region46: #{tpu_custom_call.1} parent=39 // pred_check_branch
          %2085 = sbr.rel (%p2083) target = $region48
        $region47: #{tpu_custom_call.1} parent=39 // pred_region
          %s2087 = ssub.s32 16, 16
          %2088 = vsyncadd %s2080, %s2087
          %s2089 = smul.addr %s20, 16
          %s2090 = scalar_lea.hbm %s5, %s2089
          %s2092 = sshll.u32 %s2082, 4
          %s2093 = int_to_ptr.vmem [resolvable:$true] %s2092
          %2095 = dma.vmem_to_hbm [thread:$0]  %s2093, 16, %s2090, %s2080
        $region48: #{tpu_custom_call.1} parent=39 // pred_fallthru
          _
      $region40: #{tpu_custom_call.1} parent=5 // pred_fallthru
        _
      %p2096 = scmp.le.s32.totalorder 2, %s15
      // Predicated region
      $region49: #{tpu_custom_call.1} parent=5 // pred_check
        %p2097 = pneg %p2096
      $region50: #{tpu_custom_call.1} parent=5 // pred_check_branch
        %2099 = sbr.rel (%p2097) target = $region52
      $region51: #{tpu_custom_call.1} parent=5 // pred_region
        %s2100 = ssub.s32 %s15, 2
        // Predicated region
        $region53: #{tpu_custom_call.1} parent=51 // pred_check
          %p2101 = pneg %p154
        $region54: #{tpu_custom_call.1} parent=51 // pred_check_branch
          %2103 = sbr.rel (%p2101) target = $region56
        $region55: #{tpu_custom_call.1} parent=51 // pred_region
          %s2104 = sand.u32 %s139, 1
          %s2105 = scalar_lea.sflag [#allocation6], %s2104
          %s2106 = sand.u32 %s139, 1
          %s2107 = scalar_lea.vmem [#allocation7], %s2106
          %2108 = dma.done %s2105, 16
        $region56: #{tpu_custom_call.1} parent=51 // pred_fallthru
          _
      $region52: #{tpu_custom_call.1} parent=5 // pred_fallthru
        _
    $region6: #{tpu_custom_call.1} parent=1 // loop_footer
      %s19 = sadd.s32 1, %s15
    $region7: #{tpu_custom_call.1} parent=1 // loop_footer_branch
      %14 = sbr.rel target = $region3
    $region8: #{tpu_custom_call.1} parent=1 // loop_exit
      _
    %2109 = vsyncpa [#allocation5], 1
    %s2110 = scalar_lea.sflag [#allocation5], 1
    %2111 = vsyncpa %s2110, 1
    %2112 = vsyncpa [#allocation6], 1
    %s2113 = scalar_lea.sflag [#allocation6], 1
    %2114 = vsyncpa %s2113, 1

</llo_original>
